<compile_context>
chip_gen: v5e
topology: v5e:2x2
jax: 0.10.0
libtpu: 0.0.40
codegen_flags: <defaults>
</compile_context>

<pallas_src>
import functools

import jax
import jax.numpy as jnp
from jax.experimental import pallas as pl
from jax.experimental.pallas import tpu as pltpu

_LANE = 128


def _cdiv(a, b):
    return -(-a // b)


def _round_up(a, b):
    return _cdiv(a, b) * b


def _yolo_loss_kernel(pred_ref, tgt_ref, anch_ref, out_ref, *,
                      num_anchors, num_classes):
    """Accumulate six per-lane partial statistics.

    pred_ref: (A, 5+C, TB, 128)  feature-major, lane-dense planes
    tgt_ref : (A, 6,   TB, 128)  [objectness, x, y, w, h, class]
    anch_ref: (A, 2) f32 in SMEM
    out_ref : (1, 6, TB, 128) f32, resident across grid axis 1 (the reduction):
        [0]=n_obj [1]=n_noobj [2]=box_sq_err [3]=obj_bce [4]=noobj_bce [5]=class_ce
    """
    f32 = jnp.float32
    plane = out_ref.shape[2:]                      # (TB, 128)

    @pl.when(pl.program_id(1) == 0)
    def _init():
        out_ref[...] = jnp.zeros_like(out_ref)

    n_obj_p = jnp.zeros(plane, f32)
    n_noobj_p = jnp.zeros(plane, f32)
    box_p = jnp.zeros(plane, f32)
    obj_p = jnp.zeros(plane, f32)
    noobj_p = jnp.zeros(plane, f32)
    ce_p = jnp.zeros(plane, f32)

    for a in range(num_anchors):
        t0 = tgt_ref[a, 0].astype(f32)
        m_obj = t0 == 1.0             # cells with objects
        m_noobj = t0 == 0.0           # cells without objects (pad rows are -1)

        # Confidence losses.  NOTE: the PyTorch reference applies
        # BCEWithLogits to sigmoid(pred[..., 0]) -- a *double* sigmoid.
        # That is intentional and reproduced exactly here.
        conf = jax.nn.sigmoid(pred_ref[a, 0].astype(f32))
        obj_p += jnp.where(m_obj, jnp.log1p(jnp.exp(-conf)), 0.0)     # target==1
        noobj_p += jnp.where(m_noobj, jnp.log1p(jnp.exp(conf)), 0.0)  # target==0

        # Box regression: MSE over [sigmoid(xy), exp(wh) * anchor].
        box_err = jnp.zeros(plane, f32)
        for c in range(2):
            xy = jax.nn.sigmoid(pred_ref[a, 1 + c].astype(f32))
            box_err += (xy - tgt_ref[a, 1 + c].astype(f32)) ** 2
        for c in range(2):
            wh = jnp.exp(pred_ref[a, 3 + c].astype(f32)) * anch_ref[a, c]
            box_err += (wh - tgt_ref[a, 3 + c].astype(f32)) ** 2
        # Select-before-sum: exp overflow on no-object rows must not become
        # 0 * inf = NaN (mask-multiply would do that).
        box_p += jnp.where(m_obj, box_err, 0.0)

        # Class cross-entropy over dense (TB, 128) planes (VPU max/add tree
        # over the class axis; no lane-axis reduce).
        mx = pred_ref[a, 5].astype(f32)
        for c in range(1, num_classes):
            mx = jnp.maximum(mx, pred_ref[a, 5 + c].astype(f32))
        lbl = tgt_ref[a, 5].astype(f32)
        sum_exp = jnp.zeros(plane, f32)
        picked = jnp.zeros(plane, f32)
        for c in range(num_classes):
            lg = pred_ref[a, 5 + c].astype(f32)
            sum_exp += jnp.exp(lg - mx)
            picked += jnp.where(lbl == float(c), lg, 0.0)
        lse = mx + jnp.log(sum_exp)
        ce_p += jnp.where(m_obj, lse - picked, 0.0)

        n_obj_p += m_obj.astype(f32)
        n_noobj_p += m_noobj.astype(f32)

    out_ref[0, 0] += n_obj_p
    out_ref[0, 1] += n_noobj_p
    out_ref[0, 2] += box_p
    out_ref[0, 3] += obj_p
    out_ref[0, 4] += noobj_p
    out_ref[0, 5] += ce_p


def yolo_v3_loss(pred, target, anchors, lambda_coord=10, lambda_noobj=10,
                 tile_b=128):
    """pred: (N, S, S, A, 5+C), target: (N, S, S, A, 6), anchors: (A, 2)."""
    N, S1, S2, A, D = pred.shape
    C = D - 5
    NSS = N * S1 * S2

    # ---- tiling: lane-dense rows of 128, sized by a per-step byte budget ----
    itemsize_p = jnp.dtype(pred.dtype).itemsize
    itemsize_t = jnp.dtype(target.dtype).itemsize
    bytes_per_brow = A * (D * itemsize_p + 6 * itemsize_t) * _LANE
    budget = 4 * 1024 * 1024                     # ~4 MB/step (x2 buffers < 10 MB)
    tb_budget = max(8, (budget // bytes_per_brow) // 8 * 8)
    tile_b = max(8, min(tile_b, tb_budget))

    B = _cdiv(NSS, _LANE)                        # number of 128-lane rows
    tb0 = min(tile_b, _round_up(B, 8))
    total_blocks = _cdiv(B, tb0)
    NC = 2 if total_blocks >= 2 else 1           # leading parallel split (v7x: both TCs)
    n_steps = _cdiv(total_blocks, NC)
    TB = _round_up(_cdiv(B, NC * n_steps), 8)    # rebalance -> minimal padding
    B_pad = NC * n_steps * TB
    NSS_pad = B_pad * _LANE

    # ---- feature-major, lane-dense relayout (keep native dtype) ------------
    pred_t = jnp.transpose(pred, (3, 4, 0, 1, 2)).reshape(A, D, NSS)
    tgt_t = jnp.transpose(target, (3, 4, 0, 1, 2)).reshape(A, 6, NSS)
    pad = NSS_pad - NSS
    if pad:
        pred_t = jnp.pad(pred_t, ((0, 0), (0, 0), (0, pad)))
        # padded cells get objectness = -1 so they land in neither mask
        tgt_pad = jnp.zeros((A, 6, pad), tgt_t.dtype).at[:, 0, :].set(-1)
        tgt_t = jnp.concatenate([tgt_t, tgt_pad], axis=-1)
    pred_t = pred_t.reshape(A, D, B_pad, _LANE)
    tgt_t = tgt_t.reshape(A, 6, B_pad, _LANE)
    anch = anchors.reshape(A, 2).astype(jnp.float32)

    kernel = functools.partial(_yolo_loss_kernel, num_anchors=A, num_classes=C)

    partials = pl.pallas_call(
        kernel,
        out_shape=jax.ShapeDtypeStruct((NC, 6, TB, _LANE), jnp.float32),
        grid_spec=pltpu.PrefetchScalarGridSpec(
            num_scalar_prefetch=0,
            grid=(NC, n_steps),
            in_specs=[
                pl.BlockSpec((A, D, TB, _LANE),
                             lambda i, j: (0, 0, i * n_steps + j, 0)),
                pl.BlockSpec((A, 6, TB, _LANE),
                             lambda i, j: (0, 0, i * n_steps + j, 0)),
                pl.BlockSpec(memory_space=pltpu.MemorySpace.SMEM),
            ],
            out_specs=pl.BlockSpec((1, 6, TB, _LANE),
                                   lambda i, j: (i, 0, 0, 0)),
        ),
        compiler_params=pltpu.CompilerParams(
            dimension_semantics=("parallel", "arbitrary")),
    )(pred_t, tgt_t, anch)

    # Final combine of the six scalars (matches the PyTorch means/weights).
    stats = jnp.sum(partials, axis=(0, 2, 3))    # (6,)
    n_obj, n_noobj = stats[0], stats[1]
    box_loss = stats[2] / (4.0 * n_obj)          # MSE mean over n_obj rows * 4 coords
    obj_loss = stats[3] / n_obj
    noobj_loss = stats[4] / n_noobj
    cls_loss = stats[5] / n_obj
    return (lambda_noobj * noobj_loss + obj_loss
            + lambda_coord * box_loss + cls_loss)


def _reference_loss(pred, target, anchors, lambda_coord=10, lambda_noobj=10):
    """Pure-JAX transcription of the PyTorch forward (for verification)."""
    obj = target[..., 0] == 1
    noobj = target[..., 0] == 0
    anch = anchors.reshape(1, 1, 1, 3, 2)
    wh = jnp.exp(pred[..., 3:5]) * anch
    xy = jax.nn.sigmoid(pred[..., 1:3])
    boxes = jnp.concatenate([xy, wh], axis=-1)
    n_obj = jnp.sum(obj)
    n_noobj = jnp.sum(noobj)
    box_loss = jnp.sum(
        jnp.where(obj[..., None], (boxes - target[..., 1:5]) ** 2, 0.0)
    ) / (4.0 * n_obj)
    x = jax.nn.sigmoid(pred[..., 0])
    obj_bce = jnp.sum(jnp.where(obj, jnp.log1p(jnp.exp(-x)), 0.0)) / n_obj
    noobj_bce = jnp.sum(jnp.where(noobj, jnp.log1p(jnp.exp(x)), 0.0)) / n_noobj
    logits = pred[..., 5:]
    lse = jax.nn.logsumexp(logits, axis=-1)
    lbl = target[..., 5].astype(jnp.int32)
    picked = jnp.take_along_axis(logits, lbl[..., None], axis=-1)[..., 0]
    ce = jnp.sum(jnp.where(obj, lse - picked, 0.0)) / n_obj
    return lambda_noobj * noobj_bce + obj_bce + lambda_coord * box_loss + ce


if __name__ == "__main__":
    key = jax.random.PRNGKey(0)
    N, S, A, C = 2, 8, 3, 8
    D = 5 + C
    k1, k2, k3, k4, k5 = jax.random.split(key, 5)

    pred = jax.random.normal(k1, (N, S, S, A, D), jnp.float32)

    obj = (jax.random.uniform(k2, (N, S, S, A)) < 0.3).astype(jnp.float32)
    # guarantee at least one object cell and one empty cell
    obj = obj.at[0, 0, 0, 0].set(1.0).at[0, 0, 0, 1].set(0.0)
    xy = jax.random.uniform(k3, (N, S, S, A, 2))
    wh = jax.random.uniform(k4, (N, S, S, A, 2), minval=0.5, maxval=2.0)
    cls = jax.random.randint(k5, (N, S, S, A), 0, C).astype(jnp.float32)
    target = jnp.concatenate([obj[..., None], xy, wh, cls[..., None]], axis=-1)

    anchors = jnp.array([[1.0, 1.5], [2.0, 1.0], [0.5, 0.5]], jnp.float32)

    loss = yolo_v3_loss(pred, target, anchors, lambda_coord=10, lambda_noobj=10)
    loss = jax.block_until_ready(loss)

    ref = _reference_loss(pred, target, anchors, lambda_coord=10, lambda_noobj=10)
    assert jnp.allclose(loss, ref, rtol=1e-4, atol=1e-4), (loss, ref)
    print("KERNEL_OK")
</pallas_src>

<mosaic_0001>
module attributes {stable_mosaic.version = 11 : i64} {
  func.func @_yolo_loss_kernel(%arg0: i32, %arg1: i32, %arg2: memref<3x13x8x128xf32, #tpu.memory_space<vmem>>, %arg3: memref<3x6x8x128xf32, #tpu.memory_space<vmem>>, %arg4: memref<3x2xf32, #tpu.memory_space<smem>>, %arg5: memref<1x6x8x128xf32, #tpu.memory_space<vmem>>) attributes {dimension_semantics = [#tpu.dimension_semantics<parallel>, #tpu.dimension_semantics<arbitrary>], iteration_bounds = array<i64: 1, 1>, scalar_prefetch = 0 : i64, scratch_operands = 0 : i64, tpu.core_type = #tpu.core_type<tc>, window_params = [{transform_indices = @transform_0, window_bounds = array<i64: 3, 13, 8, 128>}, {transform_indices = @transform_1, window_bounds = array<i64: 3, 6, 8, 128>}, {transform_indices = @transform_2, window_bounds = array<i64: 3, 2>}, {transform_indices = @transform_3, window_bounds = array<i64: 1, 6, 8, 128>}]} {
    %c0_i32 = arith.constant 0 : i32
    %0 = arith.cmpi eq, %arg1, %c0_i32 : i32
    %1 = arith.extui %0 : i1 to i32
    %c0_i32_0 = arith.constant 0 : i32
    %2 = arith.cmpi ne, %1, %c0_i32_0 : i32
    scf.if %2 {
      %cst_464 = arith.constant 0.000000e+00 : f32
      %627 = vector.broadcast %cst_464 : f32 to vector<1x6x8x128xf32>
      %c0_465 = arith.constant 0 : index
      %c0_466 = arith.constant 0 : index
      %c0_467 = arith.constant 0 : index
      %c0_468 = arith.constant 0 : index
      %628 = vector.load %arg5[%c0_465, %c0_466, %c0_467, %c0_468] : memref<1x6x8x128xf32, #tpu.memory_space<vmem>>, vector<1x6x8x128xf32>
      tpu.vector_store %arg5[%c0_465, %c0_466, %c0_467, %c0_468], %627 {strides = array<i32>} : memref<1x6x8x128xf32, #tpu.memory_space<vmem>>, vector<1x6x8x128xf32>,
    } else {
    }
    %cst = arith.constant 0.000000e+00 : f32
    %3 = vector.broadcast %cst : f32 to vector<8x128xf32>
    %cst_1 = arith.constant 0.000000e+00 : f32
    %4 = vector.broadcast %cst_1 : f32 to vector<8x128xf32>
    %cst_2 = arith.constant 0.000000e+00 : f32
    %5 = vector.broadcast %cst_2 : f32 to vector<8x128xf32>
    %cst_3 = arith.constant 0.000000e+00 : f32
    %6 = vector.broadcast %cst_3 : f32 to vector<8x128xf32>
    %cst_4 = arith.constant 0.000000e+00 : f32
    %7 = vector.broadcast %cst_4 : f32 to vector<8x128xf32>
    %cst_5 = arith.constant 0.000000e+00 : f32
    %8 = vector.broadcast %cst_5 : f32 to vector<8x128xf32>
    %c0 = arith.constant 0 : index
    %c0_6 = arith.constant 0 : index
    %c0_7 = arith.constant 0 : index
    %c0_8 = arith.constant 0 : index
    %9 = vector.load %arg3[%c0, %c0_6, %c0_7, %c0_8] : memref<3x6x8x128xf32, #tpu.memory_space<vmem>>, vector<1x1x8x128xf32>
    %10 = vector.shape_cast %9 : vector<1x1x8x128xf32> to vector<8x128xf32>
    %cst_9 = arith.constant 1.000000e+00 : f32
    %11 = vector.broadcast %cst_9 : f32 to vector<8x128xf32>
    %12 = arith.cmpf oeq, %10, %11 : vector<8x128xf32>
    %cst_10 = arith.constant 0.000000e+00 : f32
    %13 = vector.broadcast %cst_10 : f32 to vector<8x128xf32>
    %14 = arith.cmpf oeq, %10, %13 : vector<8x128xf32>
    %c0_11 = arith.constant 0 : index
    %c0_12 = arith.constant 0 : index
    %c0_13 = arith.constant 0 : index
    %c0_14 = arith.constant 0 : index
    %15 = vector.load %arg2[%c0_11, %c0_12, %c0_13, %c0_14] : memref<3x13x8x128xf32, #tpu.memory_space<vmem>>, vector<1x1x8x128xf32>
    %16 = vector.shape_cast %15 : vector<1x1x8x128xf32> to vector<8x128xf32>
    %17 = arith.negf %16 : vector<8x128xf32>
    %18 = math.exp %17 : vector<8x128xf32>
    %cst_15 = arith.constant 1.000000e+00 : f32
    %19 = vector.broadcast %cst_15 : f32 to vector<8x128xf32>
    %20 = arith.addf %19, %18 : vector<8x128xf32>
    %21 = arith.divf %19, %20 : vector<8x128xf32>
    %cst_16 = arith.constant 0.000000e+00 : f32
    %22 = vector.broadcast %cst_16 : f32 to vector<8x128xf32>
    %23 = arith.subf %22, %21 : vector<8x128xf32>
    %24 = math.exp %23 : vector<8x128xf32>
    %25 = math.log1p %24 : vector<8x128xf32>
    %cst_17 = arith.constant 0.000000e+00 : f32
    %26 = vector.broadcast %cst_17 : f32 to vector<8x128xf32>
    %27 = arith.select %12, %25, %26 : vector<8x128xi1>, vector<8x128xf32>
    %28 = arith.addf %6, %27 : vector<8x128xf32>
    %29 = math.exp %21 : vector<8x128xf32>
    %30 = math.log1p %29 : vector<8x128xf32>
    %cst_18 = arith.constant 0.000000e+00 : f32
    %31 = vector.broadcast %cst_18 : f32 to vector<8x128xf32>
    %32 = arith.select %14, %30, %31 : vector<8x128xi1>, vector<8x128xf32>
    %33 = arith.addf %7, %32 : vector<8x128xf32>
    %cst_19 = arith.constant 0.000000e+00 : f32
    %34 = vector.broadcast %cst_19 : f32 to vector<8x128xf32>
    %c0_20 = arith.constant 0 : index
    %c1 = arith.constant 1 : index
    %c0_21 = arith.constant 0 : index
    %c0_22 = arith.constant 0 : index
    %35 = vector.load %arg2[%c0_20, %c1, %c0_21, %c0_22] : memref<3x13x8x128xf32, #tpu.memory_space<vmem>>, vector<1x1x8x128xf32>
    %36 = vector.shape_cast %35 : vector<1x1x8x128xf32> to vector<8x128xf32>
    %37 = arith.negf %36 : vector<8x128xf32>
    %38 = math.exp %37 : vector<8x128xf32>
    %cst_23 = arith.constant 1.000000e+00 : f32
    %39 = vector.broadcast %cst_23 : f32 to vector<8x128xf32>
    %40 = arith.addf %39, %38 : vector<8x128xf32>
    %41 = arith.divf %39, %40 : vector<8x128xf32>
    %c0_24 = arith.constant 0 : index
    %c1_25 = arith.constant 1 : index
    %c0_26 = arith.constant 0 : index
    %c0_27 = arith.constant 0 : index
    %42 = vector.load %arg3[%c0_24, %c1_25, %c0_26, %c0_27] : memref<3x6x8x128xf32, #tpu.memory_space<vmem>>, vector<1x1x8x128xf32>
    %43 = vector.shape_cast %42 : vector<1x1x8x128xf32> to vector<8x128xf32>
    %44 = arith.subf %41, %43 : vector<8x128xf32>
    %45 = arith.mulf %44, %44 : vector<8x128xf32>
    %46 = arith.addf %34, %45 : vector<8x128xf32>
    %c0_28 = arith.constant 0 : index
    %c2 = arith.constant 2 : index
    %c0_29 = arith.constant 0 : index
    %c0_30 = arith.constant 0 : index
    %47 = vector.load %arg2[%c0_28, %c2, %c0_29, %c0_30] : memref<3x13x8x128xf32, #tpu.memory_space<vmem>>, vector<1x1x8x128xf32>
    %48 = vector.shape_cast %47 : vector<1x1x8x128xf32> to vector<8x128xf32>
    %49 = arith.negf %48 : vector<8x128xf32>
    %50 = math.exp %49 : vector<8x128xf32>
    %cst_31 = arith.constant 1.000000e+00 : f32
    %51 = vector.broadcast %cst_31 : f32 to vector<8x128xf32>
    %52 = arith.addf %51, %50 : vector<8x128xf32>
    %53 = arith.divf %51, %52 : vector<8x128xf32>
    %c0_32 = arith.constant 0 : index
    %c2_33 = arith.constant 2 : index
    %c0_34 = arith.constant 0 : index
    %c0_35 = arith.constant 0 : index
    %54 = vector.load %arg3[%c0_32, %c2_33, %c0_34, %c0_35] : memref<3x6x8x128xf32, #tpu.memory_space<vmem>>, vector<1x1x8x128xf32>
    %55 = vector.shape_cast %54 : vector<1x1x8x128xf32> to vector<8x128xf32>
    %56 = arith.subf %53, %55 : vector<8x128xf32>
    %57 = arith.mulf %56, %56 : vector<8x128xf32>
    %58 = arith.addf %46, %57 : vector<8x128xf32>
    %c0_36 = arith.constant 0 : index
    %c3 = arith.constant 3 : index
    %c0_37 = arith.constant 0 : index
    %c0_38 = arith.constant 0 : index
    %59 = vector.load %arg2[%c0_36, %c3, %c0_37, %c0_38] : memref<3x13x8x128xf32, #tpu.memory_space<vmem>>, vector<1x1x8x128xf32>
    %60 = vector.shape_cast %59 : vector<1x1x8x128xf32> to vector<8x128xf32>
    %61 = math.exp %60 : vector<8x128xf32>
    %c0_39 = arith.constant 0 : index
    %c0_40 = arith.constant 0 : index
    %62 = memref.load %arg4[%c0_39, %c0_40] : memref<3x2xf32, #tpu.memory_space<smem>>
    %63 = vector.broadcast %62 : f32 to vector<8x128xf32>
    %64 = arith.mulf %61, %63 : vector<8x128xf32>
    %c0_41 = arith.constant 0 : index
    %c3_42 = arith.constant 3 : index
    %c0_43 = arith.constant 0 : index
    %c0_44 = arith.constant 0 : index
    %65 = vector.load %arg3[%c0_41, %c3_42, %c0_43, %c0_44] : memref<3x6x8x128xf32, #tpu.memory_space<vmem>>, vector<1x1x8x128xf32>
    %66 = vector.shape_cast %65 : vector<1x1x8x128xf32> to vector<8x128xf32>
    %67 = arith.subf %64, %66 : vector<8x128xf32>
    %68 = arith.mulf %67, %67 : vector<8x128xf32>
    %69 = arith.addf %58, %68 : vector<8x128xf32>
    %c0_45 = arith.constant 0 : index
    %c4 = arith.constant 4 : index
    %c0_46 = arith.constant 0 : index
    %c0_47 = arith.constant 0 : index
    %70 = vector.load %arg2[%c0_45, %c4, %c0_46, %c0_47] : memref<3x13x8x128xf32, #tpu.memory_space<vmem>>, vector<1x1x8x128xf32>
    %71 = vector.shape_cast %70 : vector<1x1x8x128xf32> to vector<8x128xf32>
    %72 = math.exp %71 : vector<8x128xf32>
    %c0_48 = arith.constant 0 : index
    %c1_49 = arith.constant 1 : index
    %73 = memref.load %arg4[%c0_48, %c1_49] : memref<3x2xf32, #tpu.memory_space<smem>>
    %74 = vector.broadcast %73 : f32 to vector<8x128xf32>
    %75 = arith.mulf %72, %74 : vector<8x128xf32>
    %c0_50 = arith.constant 0 : index
    %c4_51 = arith.constant 4 : index
    %c0_52 = arith.constant 0 : index
    %c0_53 = arith.constant 0 : index
    %76 = vector.load %arg3[%c0_50, %c4_51, %c0_52, %c0_53] : memref<3x6x8x128xf32, #tpu.memory_space<vmem>>, vector<1x1x8x128xf32>
    %77 = vector.shape_cast %76 : vector<1x1x8x128xf32> to vector<8x128xf32>
    %78 = arith.subf %75, %77 : vector<8x128xf32>
    %79 = arith.mulf %78, %78 : vector<8x128xf32>
    %80 = arith.addf %69, %79 : vector<8x128xf32>
    %cst_54 = arith.constant 0.000000e+00 : f32
    %81 = vector.broadcast %cst_54 : f32 to vector<8x128xf32>
    %82 = arith.select %12, %80, %81 : vector<8x128xi1>, vector<8x128xf32>
    %83 = arith.addf %5, %82 : vector<8x128xf32>
    %c0_55 = arith.constant 0 : index
    %c5 = arith.constant 5 : index
    %c0_56 = arith.constant 0 : index
    %c0_57 = arith.constant 0 : index
    %84 = vector.load %arg2[%c0_55, %c5, %c0_56, %c0_57] : memref<3x13x8x128xf32, #tpu.memory_space<vmem>>, vector<1x1x8x128xf32>
    %85 = vector.shape_cast %84 : vector<1x1x8x128xf32> to vector<8x128xf32>
    %c0_58 = arith.constant 0 : index
    %c6 = arith.constant 6 : index
    %c0_59 = arith.constant 0 : index
    %c0_60 = arith.constant 0 : index
    %86 = vector.load %arg2[%c0_58, %c6, %c0_59, %c0_60] : memref<3x13x8x128xf32, #tpu.memory_space<vmem>>, vector<1x1x8x128xf32>
    %87 = vector.shape_cast %86 : vector<1x1x8x128xf32> to vector<8x128xf32>
    %88 = arith.maximumf %85, %87 : vector<8x128xf32>
    %c0_61 = arith.constant 0 : index
    %c7 = arith.constant 7 : index
    %c0_62 = arith.constant 0 : index
    %c0_63 = arith.constant 0 : index
    %89 = vector.load %arg2[%c0_61, %c7, %c0_62, %c0_63] : memref<3x13x8x128xf32, #tpu.memory_space<vmem>>, vector<1x1x8x128xf32>
    %90 = vector.shape_cast %89 : vector<1x1x8x128xf32> to vector<8x128xf32>
    %91 = arith.maximumf %88, %90 : vector<8x128xf32>
    %c0_64 = arith.constant 0 : index
    %c8 = arith.constant 8 : index
    %c0_65 = arith.constant 0 : index
    %c0_66 = arith.constant 0 : index
    %92 = vector.load %arg2[%c0_64, %c8, %c0_65, %c0_66] : memref<3x13x8x128xf32, #tpu.memory_space<vmem>>, vector<1x1x8x128xf32>
    %93 = vector.shape_cast %92 : vector<1x1x8x128xf32> to vector<8x128xf32>
    %94 = arith.maximumf %91, %93 : vector<8x128xf32>
    %c0_67 = arith.constant 0 : index
    %c9 = arith.constant 9 : index
    %c0_68 = arith.constant 0 : index
    %c0_69 = arith.constant 0 : index
    %95 = vector.load %arg2[%c0_67, %c9, %c0_68, %c0_69] : memref<3x13x8x128xf32, #tpu.memory_space<vmem>>, vector<1x1x8x128xf32>
    %96 = vector.shape_cast %95 : vector<1x1x8x128xf32> to vector<8x128xf32>
    %97 = arith.maximumf %94, %96 : vector<8x128xf32>
    %c0_70 = arith.constant 0 : index
    %c10 = arith.constant 10 : index
    %c0_71 = arith.constant 0 : index
    %c0_72 = arith.constant 0 : index
    %98 = vector.load %arg2[%c0_70, %c10, %c0_71, %c0_72] : memref<3x13x8x128xf32, #tpu.memory_space<vmem>>, vector<1x1x8x128xf32>
    %99 = vector.shape_cast %98 : vector<1x1x8x128xf32> to vector<8x128xf32>
    %100 = arith.maximumf %97, %99 : vector<8x128xf32>
    %c0_73 = arith.constant 0 : index
    %c11 = arith.constant 11 : index
    %c0_74 = arith.constant 0 : index
    %c0_75 = arith.constant 0 : index
    %101 = vector.load %arg2[%c0_73, %c11, %c0_74, %c0_75] : memref<3x13x8x128xf32, #tpu.memory_space<vmem>>, vector<1x1x8x128xf32>
    %102 = vector.shape_cast %101 : vector<1x1x8x128xf32> to vector<8x128xf32>
    %103 = arith.maximumf %100, %102 : vector<8x128xf32>
    %c0_76 = arith.constant 0 : index
    %c12 = arith.constant 12 : index
    %c0_77 = arith.constant 0 : index
    %c0_78 = arith.constant 0 : index
    %104 = vector.load %arg2[%c0_76, %c12, %c0_77, %c0_78] : memref<3x13x8x128xf32, #tpu.memory_space<vmem>>, vector<1x1x8x128xf32>
    %105 = vector.shape_cast %104 : vector<1x1x8x128xf32> to vector<8x128xf32>
    %106 = arith.maximumf %103, %105 : vector<8x128xf32>
    %c0_79 = arith.constant 0 : index
    %c5_80 = arith.constant 5 : index
    %c0_81 = arith.constant 0 : index
    %c0_82 = arith.constant 0 : index
    %107 = vector.load %arg3[%c0_79, %c5_80, %c0_81, %c0_82] : memref<3x6x8x128xf32, #tpu.memory_space<vmem>>, vector<1x1x8x128xf32>
    %108 = vector.shape_cast %107 : vector<1x1x8x128xf32> to vector<8x128xf32>
    %cst_83 = arith.constant 0.000000e+00 : f32
    %109 = vector.broadcast %cst_83 : f32 to vector<8x128xf32>
    %cst_84 = arith.constant 0.000000e+00 : f32
    %110 = vector.broadcast %cst_84 : f32 to vector<8x128xf32>
    %c0_85 = arith.constant 0 : index
    %c5_86 = arith.constant 5 : index
    %c0_87 = arith.constant 0 : index
    %c0_88 = arith.constant 0 : index
    %111 = vector.load %arg2[%c0_85, %c5_86, %c0_87, %c0_88] : memref<3x13x8x128xf32, #tpu.memory_space<vmem>>, vector<1x1x8x128xf32>
    %112 = vector.shape_cast %111 : vector<1x1x8x128xf32> to vector<8x128xf32>
    %113 = arith.subf %112, %106 : vector<8x128xf32>
    %114 = math.exp %113 : vector<8x128xf32>
    %115 = arith.addf %109, %114 : vector<8x128xf32>
    %cst_89 = arith.constant 0.000000e+00 : f32
    %116 = vector.broadcast %cst_89 : f32 to vector<8x128xf32>
    %117 = arith.cmpf oeq, %108, %116 : vector<8x128xf32>
    %cst_90 = arith.constant 0.000000e+00 : f32
    %118 = vector.broadcast %cst_90 : f32 to vector<8x128xf32>
    %119 = arith.select %117, %112, %118 : vector<8x128xi1>, vector<8x128xf32>
    %120 = arith.addf %110, %119 : vector<8x128xf32>
    %c0_91 = arith.constant 0 : index
    %c6_92 = arith.constant 6 : index
    %c0_93 = arith.constant 0 : index
    %c0_94 = arith.constant 0 : index
    %121 = vector.load %arg2[%c0_91, %c6_92, %c0_93, %c0_94] : memref<3x13x8x128xf32, #tpu.memory_space<vmem>>, vector<1x1x8x128xf32>
    %122 = vector.shape_cast %121 : vector<1x1x8x128xf32> to vector<8x128xf32>
    %123 = arith.subf %122, %106 : vector<8x128xf32>
    %124 = math.exp %123 : vector<8x128xf32>
    %125 = arith.addf %115, %124 : vector<8x128xf32>
    %cst_95 = arith.constant 1.000000e+00 : f32
    %126 = vector.broadcast %cst_95 : f32 to vector<8x128xf32>
    %127 = arith.cmpf oeq, %108, %126 : vector<8x128xf32>
    %cst_96 = arith.constant 0.000000e+00 : f32
    %128 = vector.broadcast %cst_96 : f32 to vector<8x128xf32>
    %129 = arith.select %127, %122, %128 : vector<8x128xi1>, vector<8x128xf32>
    %130 = arith.addf %120, %129 : vector<8x128xf32>
    %c0_97 = arith.constant 0 : index
    %c7_98 = arith.constant 7 : index
    %c0_99 = arith.constant 0 : index
    %c0_100 = arith.constant 0 : index
    %131 = vector.load %arg2[%c0_97, %c7_98, %c0_99, %c0_100] : memref<3x13x8x128xf32, #tpu.memory_space<vmem>>, vector<1x1x8x128xf32>
    %132 = vector.shape_cast %131 : vector<1x1x8x128xf32> to vector<8x128xf32>
    %133 = arith.subf %132, %106 : vector<8x128xf32>
    %134 = math.exp %133 : vector<8x128xf32>
    %135 = arith.addf %125, %134 : vector<8x128xf32>
    %cst_101 = arith.constant 2.000000e+00 : f32
    %136 = vector.broadcast %cst_101 : f32 to vector<8x128xf32>
    %137 = arith.cmpf oeq, %108, %136 : vector<8x128xf32>
    %cst_102 = arith.constant 0.000000e+00 : f32
    %138 = vector.broadcast %cst_102 : f32 to vector<8x128xf32>
    %139 = arith.select %137, %132, %138 : vector<8x128xi1>, vector<8x128xf32>
    %140 = arith.addf %130, %139 : vector<8x128xf32>
    %c0_103 = arith.constant 0 : index
    %c8_104 = arith.constant 8 : index
    %c0_105 = arith.constant 0 : index
    %c0_106 = arith.constant 0 : index
    %141 = vector.load %arg2[%c0_103, %c8_104, %c0_105, %c0_106] : memref<3x13x8x128xf32, #tpu.memory_space<vmem>>, vector<1x1x8x128xf32>
    %142 = vector.shape_cast %141 : vector<1x1x8x128xf32> to vector<8x128xf32>
    %143 = arith.subf %142, %106 : vector<8x128xf32>
    %144 = math.exp %143 : vector<8x128xf32>
    %145 = arith.addf %135, %144 : vector<8x128xf32>
    %cst_107 = arith.constant 3.000000e+00 : f32
    %146 = vector.broadcast %cst_107 : f32 to vector<8x128xf32>
    %147 = arith.cmpf oeq, %108, %146 : vector<8x128xf32>
    %cst_108 = arith.constant 0.000000e+00 : f32
    %148 = vector.broadcast %cst_108 : f32 to vector<8x128xf32>
    %149 = arith.select %147, %142, %148 : vector<8x128xi1>, vector<8x128xf32>
    %150 = arith.addf %140, %149 : vector<8x128xf32>
    %c0_109 = arith.constant 0 : index
    %c9_110 = arith.constant 9 : index
    %c0_111 = arith.constant 0 : index
    %c0_112 = arith.constant 0 : index
    %151 = vector.load %arg2[%c0_109, %c9_110, %c0_111, %c0_112] : memref<3x13x8x128xf32, #tpu.memory_space<vmem>>, vector<1x1x8x128xf32>
    %152 = vector.shape_cast %151 : vector<1x1x8x128xf32> to vector<8x128xf32>
    %153 = arith.subf %152, %106 : vector<8x128xf32>
    %154 = math.exp %153 : vector<8x128xf32>
    %155 = arith.addf %145, %154 : vector<8x128xf32>
    %cst_113 = arith.constant 4.000000e+00 : f32
    %156 = vector.broadcast %cst_113 : f32 to vector<8x128xf32>
    %157 = arith.cmpf oeq, %108, %156 : vector<8x128xf32>
    %cst_114 = arith.constant 0.000000e+00 : f32
    %158 = vector.broadcast %cst_114 : f32 to vector<8x128xf32>
    %159 = arith.select %157, %152, %158 : vector<8x128xi1>, vector<8x128xf32>
    %160 = arith.addf %150, %159 : vector<8x128xf32>
    %c0_115 = arith.constant 0 : index
    %c10_116 = arith.constant 10 : index
    %c0_117 = arith.constant 0 : index
    %c0_118 = arith.constant 0 : index
    %161 = vector.load %arg2[%c0_115, %c10_116, %c0_117, %c0_118] : memref<3x13x8x128xf32, #tpu.memory_space<vmem>>, vector<1x1x8x128xf32>
    %162 = vector.shape_cast %161 : vector<1x1x8x128xf32> to vector<8x128xf32>
    %163 = arith.subf %162, %106 : vector<8x128xf32>
    %164 = math.exp %163 : vector<8x128xf32>
    %165 = arith.addf %155, %164 : vector<8x128xf32>
    %cst_119 = arith.constant 5.000000e+00 : f32
    %166 = vector.broadcast %cst_119 : f32 to vector<8x128xf32>
    %167 = arith.cmpf oeq, %108, %166 : vector<8x128xf32>
    %cst_120 = arith.constant 0.000000e+00 : f32
    %168 = vector.broadcast %cst_120 : f32 to vector<8x128xf32>
    %169 = arith.select %167, %162, %168 : vector<8x128xi1>, vector<8x128xf32>
    %170 = arith.addf %160, %169 : vector<8x128xf32>
    %c0_121 = arith.constant 0 : index
    %c11_122 = arith.constant 11 : index
    %c0_123 = arith.constant 0 : index
    %c0_124 = arith.constant 0 : index
    %171 = vector.load %arg2[%c0_121, %c11_122, %c0_123, %c0_124] : memref<3x13x8x128xf32, #tpu.memory_space<vmem>>, vector<1x1x8x128xf32>
    %172 = vector.shape_cast %171 : vector<1x1x8x128xf32> to vector<8x128xf32>
    %173 = arith.subf %172, %106 : vector<8x128xf32>
    %174 = math.exp %173 : vector<8x128xf32>
    %175 = arith.addf %165, %174 : vector<8x128xf32>
    %cst_125 = arith.constant 6.000000e+00 : f32
    %176 = vector.broadcast %cst_125 : f32 to vector<8x128xf32>
    %177 = arith.cmpf oeq, %108, %176 : vector<8x128xf32>
    %cst_126 = arith.constant 0.000000e+00 : f32
    %178 = vector.broadcast %cst_126 : f32 to vector<8x128xf32>
    %179 = arith.select %177, %172, %178 : vector<8x128xi1>, vector<8x128xf32>
    %180 = arith.addf %170, %179 : vector<8x128xf32>
    %c0_127 = arith.constant 0 : index
    %c12_128 = arith.constant 12 : index
    %c0_129 = arith.constant 0 : index
    %c0_130 = arith.constant 0 : index
    %181 = vector.load %arg2[%c0_127, %c12_128, %c0_129, %c0_130] : memref<3x13x8x128xf32, #tpu.memory_space<vmem>>, vector<1x1x8x128xf32>
    %182 = vector.shape_cast %181 : vector<1x1x8x128xf32> to vector<8x128xf32>
    %183 = arith.subf %182, %106 : vector<8x128xf32>
    %184 = math.exp %183 : vector<8x128xf32>
    %185 = arith.addf %175, %184 : vector<8x128xf32>
    %cst_131 = arith.constant 7.000000e+00 : f32
    %186 = vector.broadcast %cst_131 : f32 to vector<8x128xf32>
    %187 = arith.cmpf oeq, %108, %186 : vector<8x128xf32>
    %cst_132 = arith.constant 0.000000e+00 : f32
    %188 = vector.broadcast %cst_132 : f32 to vector<8x128xf32>
    %189 = arith.select %187, %182, %188 : vector<8x128xi1>, vector<8x128xf32>
    %190 = arith.addf %180, %189 : vector<8x128xf32>
    %191 = math.log %185 : vector<8x128xf32>
    %192 = arith.addf %106, %191 : vector<8x128xf32>
    %193 = arith.subf %192, %190 : vector<8x128xf32>
    %cst_133 = arith.constant 0.000000e+00 : f32
    %194 = vector.broadcast %cst_133 : f32 to vector<8x128xf32>
    %195 = arith.select %12, %193, %194 : vector<8x128xi1>, vector<8x128xf32>
    %196 = arith.addf %8, %195 : vector<8x128xf32>
    %197 = arith.extui %12 : vector<8x128xi1> to vector<8x128xi32>
    %198 = arith.sitofp %197 : vector<8x128xi32> to vector<8x128xf32>
    %199 = arith.addf %3, %198 : vector<8x128xf32>
    %200 = arith.extui %14 : vector<8x128xi1> to vector<8x128xi32>
    %201 = arith.sitofp %200 : vector<8x128xi32> to vector<8x128xf32>
    %202 = arith.addf %4, %201 : vector<8x128xf32>
    %c1_134 = arith.constant 1 : index
    %c0_135 = arith.constant 0 : index
    %c0_136 = arith.constant 0 : index
    %c0_137 = arith.constant 0 : index
    %203 = vector.load %arg3[%c1_134, %c0_135, %c0_136, %c0_137] : memref<3x6x8x128xf32, #tpu.memory_space<vmem>>, vector<1x1x8x128xf32>
    %204 = vector.shape_cast %203 : vector<1x1x8x128xf32> to vector<8x128xf32>
    %cst_138 = arith.constant 1.000000e+00 : f32
    %205 = vector.broadcast %cst_138 : f32 to vector<8x128xf32>
    %206 = arith.cmpf oeq, %204, %205 : vector<8x128xf32>
    %cst_139 = arith.constant 0.000000e+00 : f32
    %207 = vector.broadcast %cst_139 : f32 to vector<8x128xf32>
    %208 = arith.cmpf oeq, %204, %207 : vector<8x128xf32>
    %c1_140 = arith.constant 1 : index
    %c0_141 = arith.constant 0 : index
    %c0_142 = arith.constant 0 : index
    %c0_143 = arith.constant 0 : index
    %209 = vector.load %arg2[%c1_140, %c0_141, %c0_142, %c0_143] : memref<3x13x8x128xf32, #tpu.memory_space<vmem>>, vector<1x1x8x128xf32>
    %210 = vector.shape_cast %209 : vector<1x1x8x128xf32> to vector<8x128xf32>
    %211 = arith.negf %210 : vector<8x128xf32>
    %212 = math.exp %211 : vector<8x128xf32>
    %cst_144 = arith.constant 1.000000e+00 : f32
    %213 = vector.broadcast %cst_144 : f32 to vector<8x128xf32>
    %214 = arith.addf %213, %212 : vector<8x128xf32>
    %215 = arith.divf %213, %214 : vector<8x128xf32>
    %cst_145 = arith.constant 0.000000e+00 : f32
    %216 = vector.broadcast %cst_145 : f32 to vector<8x128xf32>
    %217 = arith.subf %216, %215 : vector<8x128xf32>
    %218 = math.exp %217 : vector<8x128xf32>
    %219 = math.log1p %218 : vector<8x128xf32>
    %cst_146 = arith.constant 0.000000e+00 : f32
    %220 = vector.broadcast %cst_146 : f32 to vector<8x128xf32>
    %221 = arith.select %206, %219, %220 : vector<8x128xi1>, vector<8x128xf32>
    %222 = arith.addf %28, %221 : vector<8x128xf32>
    %223 = math.exp %215 : vector<8x128xf32>
    %224 = math.log1p %223 : vector<8x128xf32>
    %cst_147 = arith.constant 0.000000e+00 : f32
    %225 = vector.broadcast %cst_147 : f32 to vector<8x128xf32>
    %226 = arith.select %208, %224, %225 : vector<8x128xi1>, vector<8x128xf32>
    %227 = arith.addf %33, %226 : vector<8x128xf32>
    %cst_148 = arith.constant 0.000000e+00 : f32
    %228 = vector.broadcast %cst_148 : f32 to vector<8x128xf32>
    %c1_149 = arith.constant 1 : index
    %c1_150 = arith.constant 1 : index
    %c0_151 = arith.constant 0 : index
    %c0_152 = arith.constant 0 : index
    %229 = vector.load %arg2[%c1_149, %c1_150, %c0_151, %c0_152] : memref<3x13x8x128xf32, #tpu.memory_space<vmem>>, vector<1x1x8x128xf32>
    %230 = vector.shape_cast %229 : vector<1x1x8x128xf32> to vector<8x128xf32>
    %231 = arith.negf %230 : vector<8x128xf32>
    %232 = math.exp %231 : vector<8x128xf32>
    %cst_153 = arith.constant 1.000000e+00 : f32
    %233 = vector.broadcast %cst_153 : f32 to vector<8x128xf32>
    %234 = arith.addf %233, %232 : vector<8x128xf32>
    %235 = arith.divf %233, %234 : vector<8x128xf32>
    %c1_154 = arith.constant 1 : index
    %c1_155 = arith.constant 1 : index
    %c0_156 = arith.constant 0 : index
    %c0_157 = arith.constant 0 : index
    %236 = vector.load %arg3[%c1_154, %c1_155, %c0_156, %c0_157] : memref<3x6x8x128xf32, #tpu.memory_space<vmem>>, vector<1x1x8x128xf32>
    %237 = vector.shape_cast %236 : vector<1x1x8x128xf32> to vector<8x128xf32>
    %238 = arith.subf %235, %237 : vector<8x128xf32>
    %239 = arith.mulf %238, %238 : vector<8x128xf32>
    %240 = arith.addf %228, %239 : vector<8x128xf32>
    %c1_158 = arith.constant 1 : index
    %c2_159 = arith.constant 2 : index
    %c0_160 = arith.constant 0 : index
    %c0_161 = arith.constant 0 : index
    %241 = vector.load %arg2[%c1_158, %c2_159, %c0_160, %c0_161] : memref<3x13x8x128xf32, #tpu.memory_space<vmem>>, vector<1x1x8x128xf32>
    %242 = vector.shape_cast %241 : vector<1x1x8x128xf32> to vector<8x128xf32>
    %243 = arith.negf %242 : vector<8x128xf32>
    %244 = math.exp %243 : vector<8x128xf32>
    %cst_162 = arith.constant 1.000000e+00 : f32
    %245 = vector.broadcast %cst_162 : f32 to vector<8x128xf32>
    %246 = arith.addf %245, %244 : vector<8x128xf32>
    %247 = arith.divf %245, %246 : vector<8x128xf32>
    %c1_163 = arith.constant 1 : index
    %c2_164 = arith.constant 2 : index
    %c0_165 = arith.constant 0 : index
    %c0_166 = arith.constant 0 : index
    %248 = vector.load %arg3[%c1_163, %c2_164, %c0_165, %c0_166] : memref<3x6x8x128xf32, #tpu.memory_space<vmem>>, vector<1x1x8x128xf32>
    %249 = vector.shape_cast %248 : vector<1x1x8x128xf32> to vector<8x128xf32>
    %250 = arith.subf %247, %249 : vector<8x128xf32>
    %251 = arith.mulf %250, %250 : vector<8x128xf32>
    %252 = arith.addf %240, %251 : vector<8x128xf32>
    %c1_167 = arith.constant 1 : index
    %c3_168 = arith.constant 3 : index
    %c0_169 = arith.constant 0 : index
    %c0_170 = arith.constant 0 : index
    %253 = vector.load %arg2[%c1_167, %c3_168, %c0_169, %c0_170] : memref<3x13x8x128xf32, #tpu.memory_space<vmem>>, vector<1x1x8x128xf32>
    %254 = vector.shape_cast %253 : vector<1x1x8x128xf32> to vector<8x128xf32>
    %255 = math.exp %254 : vector<8x128xf32>
    %c1_171 = arith.constant 1 : index
    %c0_172 = arith.constant 0 : index
    %256 = memref.load %arg4[%c1_171, %c0_172] : memref<3x2xf32, #tpu.memory_space<smem>>
    %257 = vector.broadcast %256 : f32 to vector<8x128xf32>
    %258 = arith.mulf %255, %257 : vector<8x128xf32>
    %c1_173 = arith.constant 1 : index
    %c3_174 = arith.constant 3 : index
    %c0_175 = arith.constant 0 : index
    %c0_176 = arith.constant 0 : index
    %259 = vector.load %arg3[%c1_173, %c3_174, %c0_175, %c0_176] : memref<3x6x8x128xf32, #tpu.memory_space<vmem>>, vector<1x1x8x128xf32>
    %260 = vector.shape_cast %259 : vector<1x1x8x128xf32> to vector<8x128xf32>
    %261 = arith.subf %258, %260 : vector<8x128xf32>
    %262 = arith.mulf %261, %261 : vector<8x128xf32>
    %263 = arith.addf %252, %262 : vector<8x128xf32>
    %c1_177 = arith.constant 1 : index
    %c4_178 = arith.constant 4 : index
    %c0_179 = arith.constant 0 : index
    %c0_180 = arith.constant 0 : index
    %264 = vector.load %arg2[%c1_177, %c4_178, %c0_179, %c0_180] : memref<3x13x8x128xf32, #tpu.memory_space<vmem>>, vector<1x1x8x128xf32>
    %265 = vector.shape_cast %264 : vector<1x1x8x128xf32> to vector<8x128xf32>
    %266 = math.exp %265 : vector<8x128xf32>
    %c1_181 = arith.constant 1 : index
    %c1_182 = arith.constant 1 : index
    %267 = memref.load %arg4[%c1_181, %c1_182] : memref<3x2xf32, #tpu.memory_space<smem>>
    %268 = vector.broadcast %267 : f32 to vector<8x128xf32>
    %269 = arith.mulf %266, %268 : vector<8x128xf32>
    %c1_183 = arith.constant 1 : index
    %c4_184 = arith.constant 4 : index
    %c0_185 = arith.constant 0 : index
    %c0_186 = arith.constant 0 : index
    %270 = vector.load %arg3[%c1_183, %c4_184, %c0_185, %c0_186] : memref<3x6x8x128xf32, #tpu.memory_space<vmem>>, vector<1x1x8x128xf32>
    %271 = vector.shape_cast %270 : vector<1x1x8x128xf32> to vector<8x128xf32>
    %272 = arith.subf %269, %271 : vector<8x128xf32>
    %273 = arith.mulf %272, %272 : vector<8x128xf32>
    %274 = arith.addf %263, %273 : vector<8x128xf32>
    %cst_187 = arith.constant 0.000000e+00 : f32
    %275 = vector.broadcast %cst_187 : f32 to vector<8x128xf32>
    %276 = arith.select %206, %274, %275 : vector<8x128xi1>, vector<8x128xf32>
    %277 = arith.addf %83, %276 : vector<8x128xf32>
    %c1_188 = arith.constant 1 : index
    %c5_189 = arith.constant 5 : index
    %c0_190 = arith.constant 0 : index
    %c0_191 = arith.constant 0 : index
    %278 = vector.load %arg2[%c1_188, %c5_189, %c0_190, %c0_191] : memref<3x13x8x128xf32, #tpu.memory_space<vmem>>, vector<1x1x8x128xf32>
    %279 = vector.shape_cast %278 : vector<1x1x8x128xf32> to vector<8x128xf32>
    %c1_192 = arith.constant 1 : index
    %c6_193 = arith.constant 6 : index
    %c0_194 = arith.constant 0 : index
    %c0_195 = arith.constant 0 : index
    %280 = vector.load %arg2[%c1_192, %c6_193, %c0_194, %c0_195] : memref<3x13x8x128xf32, #tpu.memory_space<vmem>>, vector<1x1x8x128xf32>
    %281 = vector.shape_cast %280 : vector<1x1x8x128xf32> to vector<8x128xf32>
    %282 = arith.maximumf %279, %281 : vector<8x128xf32>
    %c1_196 = arith.constant 1 : index
    %c7_197 = arith.constant 7 : index
    %c0_198 = arith.constant 0 : index
    %c0_199 = arith.constant 0 : index
    %283 = vector.load %arg2[%c1_196, %c7_197, %c0_198, %c0_199] : memref<3x13x8x128xf32, #tpu.memory_space<vmem>>, vector<1x1x8x128xf32>
    %284 = vector.shape_cast %283 : vector<1x1x8x128xf32> to vector<8x128xf32>
    %285 = arith.maximumf %282, %284 : vector<8x128xf32>
    %c1_200 = arith.constant 1 : index
    %c8_201 = arith.constant 8 : index
    %c0_202 = arith.constant 0 : index
    %c0_203 = arith.constant 0 : index
    %286 = vector.load %arg2[%c1_200, %c8_201, %c0_202, %c0_203] : memref<3x13x8x128xf32, #tpu.memory_space<vmem>>, vector<1x1x8x128xf32>
    %287 = vector.shape_cast %286 : vector<1x1x8x128xf32> to vector<8x128xf32>
    %288 = arith.maximumf %285, %287 : vector<8x128xf32>
    %c1_204 = arith.constant 1 : index
    %c9_205 = arith.constant 9 : index
    %c0_206 = arith.constant 0 : index
    %c0_207 = arith.constant 0 : index
    %289 = vector.load %arg2[%c1_204, %c9_205, %c0_206, %c0_207] : memref<3x13x8x128xf32, #tpu.memory_space<vmem>>, vector<1x1x8x128xf32>
    %290 = vector.shape_cast %289 : vector<1x1x8x128xf32> to vector<8x128xf32>
    %291 = arith.maximumf %288, %290 : vector<8x128xf32>
    %c1_208 = arith.constant 1 : index
    %c10_209 = arith.constant 10 : index
    %c0_210 = arith.constant 0 : index
    %c0_211 = arith.constant 0 : index
    %292 = vector.load %arg2[%c1_208, %c10_209, %c0_210, %c0_211] : memref<3x13x8x128xf32, #tpu.memory_space<vmem>>, vector<1x1x8x128xf32>
    %293 = vector.shape_cast %292 : vector<1x1x8x128xf32> to vector<8x128xf32>
    %294 = arith.maximumf %291, %293 : vector<8x128xf32>
    %c1_212 = arith.constant 1 : index
    %c11_213 = arith.constant 11 : index
    %c0_214 = arith.constant 0 : index
    %c0_215 = arith.constant 0 : index
    %295 = vector.load %arg2[%c1_212, %c11_213, %c0_214, %c0_215] : memref<3x13x8x128xf32, #tpu.memory_space<vmem>>, vector<1x1x8x128xf32>
    %296 = vector.shape_cast %295 : vector<1x1x8x128xf32> to vector<8x128xf32>
    %297 = arith.maximumf %294, %296 : vector<8x128xf32>
    %c1_216 = arith.constant 1 : index
    %c12_217 = arith.constant 12 : index
    %c0_218 = arith.constant 0 : index
    %c0_219 = arith.constant 0 : index
    %298 = vector.load %arg2[%c1_216, %c12_217, %c0_218, %c0_219] : memref<3x13x8x128xf32, #tpu.memory_space<vmem>>, vector<1x1x8x128xf32>
    %299 = vector.shape_cast %298 : vector<1x1x8x128xf32> to vector<8x128xf32>
    %300 = arith.maximumf %297, %299 : vector<8x128xf32>
    %c1_220 = arith.constant 1 : index
    %c5_221 = arith.constant 5 : index
    %c0_222 = arith.constant 0 : index
    %c0_223 = arith.constant 0 : index
    %301 = vector.load %arg3[%c1_220, %c5_221, %c0_222, %c0_223] : memref<3x6x8x128xf32, #tpu.memory_space<vmem>>, vector<1x1x8x128xf32>
    %302 = vector.shape_cast %301 : vector<1x1x8x128xf32> to vector<8x128xf32>
    %cst_224 = arith.constant 0.000000e+00 : f32
    %303 = vector.broadcast %cst_224 : f32 to vector<8x128xf32>
    %cst_225 = arith.constant 0.000000e+00 : f32
    %304 = vector.broadcast %cst_225 : f32 to vector<8x128xf32>
    %c1_226 = arith.constant 1 : index
    %c5_227 = arith.constant 5 : index
    %c0_228 = arith.constant 0 : index
    %c0_229 = arith.constant 0 : index
    %305 = vector.load %arg2[%c1_226, %c5_227, %c0_228, %c0_229] : memref<3x13x8x128xf32, #tpu.memory_space<vmem>>, vector<1x1x8x128xf32>
    %306 = vector.shape_cast %305 : vector<1x1x8x128xf32> to vector<8x128xf32>
    %307 = arith.subf %306, %300 : vector<8x128xf32>
    %308 = math.exp %307 : vector<8x128xf32>
    %309 = arith.addf %303, %308 : vector<8x128xf32>
    %cst_230 = arith.constant 0.000000e+00 : f32
    %310 = vector.broadcast %cst_230 : f32 to vector<8x128xf32>
    %311 = arith.cmpf oeq, %302, %310 : vector<8x128xf32>
    %cst_231 = arith.constant 0.000000e+00 : f32
    %312 = vector.broadcast %cst_231 : f32 to vector<8x128xf32>
    %313 = arith.select %311, %306, %312 : vector<8x128xi1>, vector<8x128xf32>
    %314 = arith.addf %304, %313 : vector<8x128xf32>
    %c1_232 = arith.constant 1 : index
    %c6_233 = arith.constant 6 : index
    %c0_234 = arith.constant 0 : index
    %c0_235 = arith.constant 0 : index
    %315 = vector.load %arg2[%c1_232, %c6_233, %c0_234, %c0_235] : memref<3x13x8x128xf32, #tpu.memory_space<vmem>>, vector<1x1x8x128xf32>
    %316 = vector.shape_cast %315 : vector<1x1x8x128xf32> to vector<8x128xf32>
    %317 = arith.subf %316, %300 : vector<8x128xf32>
    %318 = math.exp %317 : vector<8x128xf32>
    %319 = arith.addf %309, %318 : vector<8x128xf32>
    %cst_236 = arith.constant 1.000000e+00 : f32
    %320 = vector.broadcast %cst_236 : f32 to vector<8x128xf32>
    %321 = arith.cmpf oeq, %302, %320 : vector<8x128xf32>
    %cst_237 = arith.constant 0.000000e+00 : f32
    %322 = vector.broadcast %cst_237 : f32 to vector<8x128xf32>
    %323 = arith.select %321, %316, %322 : vector<8x128xi1>, vector<8x128xf32>
    %324 = arith.addf %314, %323 : vector<8x128xf32>
    %c1_238 = arith.constant 1 : index
    %c7_239 = arith.constant 7 : index
    %c0_240 = arith.constant 0 : index
    %c0_241 = arith.constant 0 : index
    %325 = vector.load %arg2[%c1_238, %c7_239, %c0_240, %c0_241] : memref<3x13x8x128xf32, #tpu.memory_space<vmem>>, vector<1x1x8x128xf32>
    %326 = vector.shape_cast %325 : vector<1x1x8x128xf32> to vector<8x128xf32>
    %327 = arith.subf %326, %300 : vector<8x128xf32>
    %328 = math.exp %327 : vector<8x128xf32>
    %329 = arith.addf %319, %328 : vector<8x128xf32>
    %cst_242 = arith.constant 2.000000e+00 : f32
    %330 = vector.broadcast %cst_242 : f32 to vector<8x128xf32>
    %331 = arith.cmpf oeq, %302, %330 : vector<8x128xf32>
    %cst_243 = arith.constant 0.000000e+00 : f32
    %332 = vector.broadcast %cst_243 : f32 to vector<8x128xf32>
    %333 = arith.select %331, %326, %332 : vector<8x128xi1>, vector<8x128xf32>
    %334 = arith.addf %324, %333 : vector<8x128xf32>
    %c1_244 = arith.constant 1 : index
    %c8_245 = arith.constant 8 : index
    %c0_246 = arith.constant 0 : index
    %c0_247 = arith.constant 0 : index
    %335 = vector.load %arg2[%c1_244, %c8_245, %c0_246, %c0_247] : memref<3x13x8x128xf32, #tpu.memory_space<vmem>>, vector<1x1x8x128xf32>
    %336 = vector.shape_cast %335 : vector<1x1x8x128xf32> to vector<8x128xf32>
    %337 = arith.subf %336, %300 : vector<8x128xf32>
    %338 = math.exp %337 : vector<8x128xf32>
    %339 = arith.addf %329, %338 : vector<8x128xf32>
    %cst_248 = arith.constant 3.000000e+00 : f32
    %340 = vector.broadcast %cst_248 : f32 to vector<8x128xf32>
    %341 = arith.cmpf oeq, %302, %340 : vector<8x128xf32>
    %cst_249 = arith.constant 0.000000e+00 : f32
    %342 = vector.broadcast %cst_249 : f32 to vector<8x128xf32>
    %343 = arith.select %341, %336, %342 : vector<8x128xi1>, vector<8x128xf32>
    %344 = arith.addf %334, %343 : vector<8x128xf32>
    %c1_250 = arith.constant 1 : index
    %c9_251 = arith.constant 9 : index
    %c0_252 = arith.constant 0 : index
    %c0_253 = arith.constant 0 : index
    %345 = vector.load %arg2[%c1_250, %c9_251, %c0_252, %c0_253] : memref<3x13x8x128xf32, #tpu.memory_space<vmem>>, vector<1x1x8x128xf32>
    %346 = vector.shape_cast %345 : vector<1x1x8x128xf32> to vector<8x128xf32>
    %347 = arith.subf %346, %300 : vector<8x128xf32>
    %348 = math.exp %347 : vector<8x128xf32>
    %349 = arith.addf %339, %348 : vector<8x128xf32>
    %cst_254 = arith.constant 4.000000e+00 : f32
    %350 = vector.broadcast %cst_254 : f32 to vector<8x128xf32>
    %351 = arith.cmpf oeq, %302, %350 : vector<8x128xf32>
    %cst_255 = arith.constant 0.000000e+00 : f32
    %352 = vector.broadcast %cst_255 : f32 to vector<8x128xf32>
    %353 = arith.select %351, %346, %352 : vector<8x128xi1>, vector<8x128xf32>
    %354 = arith.addf %344, %353 : vector<8x128xf32>
    %c1_256 = arith.constant 1 : index
    %c10_257 = arith.constant 10 : index
    %c0_258 = arith.constant 0 : index
    %c0_259 = arith.constant 0 : index
    %355 = vector.load %arg2[%c1_256, %c10_257, %c0_258, %c0_259] : memref<3x13x8x128xf32, #tpu.memory_space<vmem>>, vector<1x1x8x128xf32>
    %356 = vector.shape_cast %355 : vector<1x1x8x128xf32> to vector<8x128xf32>
    %357 = arith.subf %356, %300 : vector<8x128xf32>
    %358 = math.exp %357 : vector<8x128xf32>
    %359 = arith.addf %349, %358 : vector<8x128xf32>
    %cst_260 = arith.constant 5.000000e+00 : f32
    %360 = vector.broadcast %cst_260 : f32 to vector<8x128xf32>
    %361 = arith.cmpf oeq, %302, %360 : vector<8x128xf32>
    %cst_261 = arith.constant 0.000000e+00 : f32
    %362 = vector.broadcast %cst_261 : f32 to vector<8x128xf32>
    %363 = arith.select %361, %356, %362 : vector<8x128xi1>, vector<8x128xf32>
    %364 = arith.addf %354, %363 : vector<8x128xf32>
    %c1_262 = arith.constant 1 : index
    %c11_263 = arith.constant 11 : index
    %c0_264 = arith.constant 0 : index
    %c0_265 = arith.constant 0 : index
    %365 = vector.load %arg2[%c1_262, %c11_263, %c0_264, %c0_265] : memref<3x13x8x128xf32, #tpu.memory_space<vmem>>, vector<1x1x8x128xf32>
    %366 = vector.shape_cast %365 : vector<1x1x8x128xf32> to vector<8x128xf32>
    %367 = arith.subf %366, %300 : vector<8x128xf32>
    %368 = math.exp %367 : vector<8x128xf32>
    %369 = arith.addf %359, %368 : vector<8x128xf32>
    %cst_266 = arith.constant 6.000000e+00 : f32
    %370 = vector.broadcast %cst_266 : f32 to vector<8x128xf32>
    %371 = arith.cmpf oeq, %302, %370 : vector<8x128xf32>
    %cst_267 = arith.constant 0.000000e+00 : f32
    %372 = vector.broadcast %cst_267 : f32 to vector<8x128xf32>
    %373 = arith.select %371, %366, %372 : vector<8x128xi1>, vector<8x128xf32>
    %374 = arith.addf %364, %373 : vector<8x128xf32>
    %c1_268 = arith.constant 1 : index
    %c12_269 = arith.constant 12 : index
    %c0_270 = arith.constant 0 : index
    %c0_271 = arith.constant 0 : index
    %375 = vector.load %arg2[%c1_268, %c12_269, %c0_270, %c0_271] : memref<3x13x8x128xf32, #tpu.memory_space<vmem>>, vector<1x1x8x128xf32>
    %376 = vector.shape_cast %375 : vector<1x1x8x128xf32> to vector<8x128xf32>
    %377 = arith.subf %376, %300 : vector<8x128xf32>
    %378 = math.exp %377 : vector<8x128xf32>
    %379 = arith.addf %369, %378 : vector<8x128xf32>
    %cst_272 = arith.constant 7.000000e+00 : f32
    %380 = vector.broadcast %cst_272 : f32 to vector<8x128xf32>
    %381 = arith.cmpf oeq, %302, %380 : vector<8x128xf32>
    %cst_273 = arith.constant 0.000000e+00 : f32
    %382 = vector.broadcast %cst_273 : f32 to vector<8x128xf32>
    %383 = arith.select %381, %376, %382 : vector<8x128xi1>, vector<8x128xf32>
    %384 = arith.addf %374, %383 : vector<8x128xf32>
    %385 = math.log %379 : vector<8x128xf32>
    %386 = arith.addf %300, %385 : vector<8x128xf32>
    %387 = arith.subf %386, %384 : vector<8x128xf32>
    %cst_274 = arith.constant 0.000000e+00 : f32
    %388 = vector.broadcast %cst_274 : f32 to vector<8x128xf32>
    %389 = arith.select %206, %387, %388 : vector<8x128xi1>, vector<8x128xf32>
    %390 = arith.addf %196, %389 : vector<8x128xf32>
    %391 = arith.extui %206 : vector<8x128xi1> to vector<8x128xi32>
    %392 = arith.sitofp %391 : vector<8x128xi32> to vector<8x128xf32>
    %393 = arith.addf %199, %392 : vector<8x128xf32>
    %394 = arith.extui %208 : vector<8x128xi1> to vector<8x128xi32>
    %395 = arith.sitofp %394 : vector<8x128xi32> to vector<8x128xf32>
    %396 = arith.addf %202, %395 : vector<8x128xf32>
    %c2_275 = arith.constant 2 : index
    %c0_276 = arith.constant 0 : index
    %c0_277 = arith.constant 0 : index
    %c0_278 = arith.constant 0 : index
    %397 = vector.load %arg3[%c2_275, %c0_276, %c0_277, %c0_278] : memref<3x6x8x128xf32, #tpu.memory_space<vmem>>, vector<1x1x8x128xf32>
    %398 = vector.shape_cast %397 : vector<1x1x8x128xf32> to vector<8x128xf32>
    %cst_279 = arith.constant 1.000000e+00 : f32
    %399 = vector.broadcast %cst_279 : f32 to vector<8x128xf32>
    %400 = arith.cmpf oeq, %398, %399 : vector<8x128xf32>
    %cst_280 = arith.constant 0.000000e+00 : f32
    %401 = vector.broadcast %cst_280 : f32 to vector<8x128xf32>
    %402 = arith.cmpf oeq, %398, %401 : vector<8x128xf32>
    %c2_281 = arith.constant 2 : index
    %c0_282 = arith.constant 0 : index
    %c0_283 = arith.constant 0 : index
    %c0_284 = arith.constant 0 : index
    %403 = vector.load %arg2[%c2_281, %c0_282, %c0_283, %c0_284] : memref<3x13x8x128xf32, #tpu.memory_space<vmem>>, vector<1x1x8x128xf32>
    %404 = vector.shape_cast %403 : vector<1x1x8x128xf32> to vector<8x128xf32>
    %405 = arith.negf %404 : vector<8x128xf32>
    %406 = math.exp %405 : vector<8x128xf32>
    %cst_285 = arith.constant 1.000000e+00 : f32
    %407 = vector.broadcast %cst_285 : f32 to vector<8x128xf32>
    %408 = arith.addf %407, %406 : vector<8x128xf32>
    %409 = arith.divf %407, %408 : vector<8x128xf32>
    %cst_286 = arith.constant 0.000000e+00 : f32
    %410 = vector.broadcast %cst_286 : f32 to vector<8x128xf32>
    %411 = arith.subf %410, %409 : vector<8x128xf32>
    %412 = math.exp %411 : vector<8x128xf32>
    %413 = math.log1p %412 : vector<8x128xf32>
    %cst_287 = arith.constant 0.000000e+00 : f32
    %414 = vector.broadcast %cst_287 : f32 to vector<8x128xf32>
    %415 = arith.select %400, %413, %414 : vector<8x128xi1>, vector<8x128xf32>
    %416 = arith.addf %222, %415 : vector<8x128xf32>
    %417 = math.exp %409 : vector<8x128xf32>
    %418 = math.log1p %417 : vector<8x128xf32>
    %cst_288 = arith.constant 0.000000e+00 : f32
    %419 = vector.broadcast %cst_288 : f32 to vector<8x128xf32>
    %420 = arith.select %402, %418, %419 : vector<8x128xi1>, vector<8x128xf32>
    %421 = arith.addf %227, %420 : vector<8x128xf32>
    %cst_289 = arith.constant 0.000000e+00 : f32
    %422 = vector.broadcast %cst_289 : f32 to vector<8x128xf32>
    %c2_290 = arith.constant 2 : index
    %c1_291 = arith.constant 1 : index
    %c0_292 = arith.constant 0 : index
    %c0_293 = arith.constant 0 : index
    %423 = vector.load %arg2[%c2_290, %c1_291, %c0_292, %c0_293] : memref<3x13x8x128xf32, #tpu.memory_space<vmem>>, vector<1x1x8x128xf32>
    %424 = vector.shape_cast %423 : vector<1x1x8x128xf32> to vector<8x128xf32>
    %425 = arith.negf %424 : vector<8x128xf32>
    %426 = math.exp %425 : vector<8x128xf32>
    %cst_294 = arith.constant 1.000000e+00 : f32
    %427 = vector.broadcast %cst_294 : f32 to vector<8x128xf32>
    %428 = arith.addf %427, %426 : vector<8x128xf32>
    %429 = arith.divf %427, %428 : vector<8x128xf32>
    %c2_295 = arith.constant 2 : index
    %c1_296 = arith.constant 1 : index
    %c0_297 = arith.constant 0 : index
    %c0_298 = arith.constant 0 : index
    %430 = vector.load %arg3[%c2_295, %c1_296, %c0_297, %c0_298] : memref<3x6x8x128xf32, #tpu.memory_space<vmem>>, vector<1x1x8x128xf32>
    %431 = vector.shape_cast %430 : vector<1x1x8x128xf32> to vector<8x128xf32>
    %432 = arith.subf %429, %431 : vector<8x128xf32>
    %433 = arith.mulf %432, %432 : vector<8x128xf32>
    %434 = arith.addf %422, %433 : vector<8x128xf32>
    %c2_299 = arith.constant 2 : index
    %c2_300 = arith.constant 2 : index
    %c0_301 = arith.constant 0 : index
    %c0_302 = arith.constant 0 : index
    %435 = vector.load %arg2[%c2_299, %c2_300, %c0_301, %c0_302] : memref<3x13x8x128xf32, #tpu.memory_space<vmem>>, vector<1x1x8x128xf32>
    %436 = vector.shape_cast %435 : vector<1x1x8x128xf32> to vector<8x128xf32>
    %437 = arith.negf %436 : vector<8x128xf32>
    %438 = math.exp %437 : vector<8x128xf32>
    %cst_303 = arith.constant 1.000000e+00 : f32
    %439 = vector.broadcast %cst_303 : f32 to vector<8x128xf32>
    %440 = arith.addf %439, %438 : vector<8x128xf32>
    %441 = arith.divf %439, %440 : vector<8x128xf32>
    %c2_304 = arith.constant 2 : index
    %c2_305 = arith.constant 2 : index
    %c0_306 = arith.constant 0 : index
    %c0_307 = arith.constant 0 : index
    %442 = vector.load %arg3[%c2_304, %c2_305, %c0_306, %c0_307] : memref<3x6x8x128xf32, #tpu.memory_space<vmem>>, vector<1x1x8x128xf32>
    %443 = vector.shape_cast %442 : vector<1x1x8x128xf32> to vector<8x128xf32>
    %444 = arith.subf %441, %443 : vector<8x128xf32>
    %445 = arith.mulf %444, %444 : vector<8x128xf32>
    %446 = arith.addf %434, %445 : vector<8x128xf32>
    %c2_308 = arith.constant 2 : index
    %c3_309 = arith.constant 3 : index
    %c0_310 = arith.constant 0 : index
    %c0_311 = arith.constant 0 : index
    %447 = vector.load %arg2[%c2_308, %c3_309, %c0_310, %c0_311] : memref<3x13x8x128xf32, #tpu.memory_space<vmem>>, vector<1x1x8x128xf32>
    %448 = vector.shape_cast %447 : vector<1x1x8x128xf32> to vector<8x128xf32>
    %449 = math.exp %448 : vector<8x128xf32>
    %c2_312 = arith.constant 2 : index
    %c0_313 = arith.constant 0 : index
    %450 = memref.load %arg4[%c2_312, %c0_313] : memref<3x2xf32, #tpu.memory_space<smem>>
    %451 = vector.broadcast %450 : f32 to vector<8x128xf32>
    %452 = arith.mulf %449, %451 : vector<8x128xf32>
    %c2_314 = arith.constant 2 : index
    %c3_315 = arith.constant 3 : index
    %c0_316 = arith.constant 0 : index
    %c0_317 = arith.constant 0 : index
    %453 = vector.load %arg3[%c2_314, %c3_315, %c0_316, %c0_317] : memref<3x6x8x128xf32, #tpu.memory_space<vmem>>, vector<1x1x8x128xf32>
    %454 = vector.shape_cast %453 : vector<1x1x8x128xf32> to vector<8x128xf32>
    %455 = arith.subf %452, %454 : vector<8x128xf32>
    %456 = arith.mulf %455, %455 : vector<8x128xf32>
    %457 = arith.addf %446, %456 : vector<8x128xf32>
    %c2_318 = arith.constant 2 : index
    %c4_319 = arith.constant 4 : index
    %c0_320 = arith.constant 0 : index
    %c0_321 = arith.constant 0 : index
    %458 = vector.load %arg2[%c2_318, %c4_319, %c0_320, %c0_321] : memref<3x13x8x128xf32, #tpu.memory_space<vmem>>, vector<1x1x8x128xf32>
    %459 = vector.shape_cast %458 : vector<1x1x8x128xf32> to vector<8x128xf32>
    %460 = math.exp %459 : vector<8x128xf32>
    %c2_322 = arith.constant 2 : index
    %c1_323 = arith.constant 1 : index
    %461 = memref.load %arg4[%c2_322, %c1_323] : memref<3x2xf32, #tpu.memory_space<smem>>
    %462 = vector.broadcast %461 : f32 to vector<8x128xf32>
    %463 = arith.mulf %460, %462 : vector<8x128xf32>
    %c2_324 = arith.constant 2 : index
    %c4_325 = arith.constant 4 : index
    %c0_326 = arith.constant 0 : index
    %c0_327 = arith.constant 0 : index
    %464 = vector.load %arg3[%c2_324, %c4_325, %c0_326, %c0_327] : memref<3x6x8x128xf32, #tpu.memory_space<vmem>>, vector<1x1x8x128xf32>
    %465 = vector.shape_cast %464 : vector<1x1x8x128xf32> to vector<8x128xf32>
    %466 = arith.subf %463, %465 : vector<8x128xf32>
    %467 = arith.mulf %466, %466 : vector<8x128xf32>
    %468 = arith.addf %457, %467 : vector<8x128xf32>
    %cst_328 = arith.constant 0.000000e+00 : f32
    %469 = vector.broadcast %cst_328 : f32 to vector<8x128xf32>
    %470 = arith.select %400, %468, %469 : vector<8x128xi1>, vector<8x128xf32>
    %471 = arith.addf %277, %470 : vector<8x128xf32>
    %c2_329 = arith.constant 2 : index
    %c5_330 = arith.constant 5 : index
    %c0_331 = arith.constant 0 : index
    %c0_332 = arith.constant 0 : index
    %472 = vector.load %arg2[%c2_329, %c5_330, %c0_331, %c0_332] : memref<3x13x8x128xf32, #tpu.memory_space<vmem>>, vector<1x1x8x128xf32>
    %473 = vector.shape_cast %472 : vector<1x1x8x128xf32> to vector<8x128xf32>
    %c2_333 = arith.constant 2 : index
    %c6_334 = arith.constant 6 : index
    %c0_335 = arith.constant 0 : index
    %c0_336 = arith.constant 0 : index
    %474 = vector.load %arg2[%c2_333, %c6_334, %c0_335, %c0_336] : memref<3x13x8x128xf32, #tpu.memory_space<vmem>>, vector<1x1x8x128xf32>
    %475 = vector.shape_cast %474 : vector<1x1x8x128xf32> to vector<8x128xf32>
    %476 = arith.maximumf %473, %475 : vector<8x128xf32>
    %c2_337 = arith.constant 2 : index
    %c7_338 = arith.constant 7 : index
    %c0_339 = arith.constant 0 : index
    %c0_340 = arith.constant 0 : index
    %477 = vector.load %arg2[%c2_337, %c7_338, %c0_339, %c0_340] : memref<3x13x8x128xf32, #tpu.memory_space<vmem>>, vector<1x1x8x128xf32>
    %478 = vector.shape_cast %477 : vector<1x1x8x128xf32> to vector<8x128xf32>
    %479 = arith.maximumf %476, %478 : vector<8x128xf32>
    %c2_341 = arith.constant 2 : index
    %c8_342 = arith.constant 8 : index
    %c0_343 = arith.constant 0 : index
    %c0_344 = arith.constant 0 : index
    %480 = vector.load %arg2[%c2_341, %c8_342, %c0_343, %c0_344] : memref<3x13x8x128xf32, #tpu.memory_space<vmem>>, vector<1x1x8x128xf32>
    %481 = vector.shape_cast %480 : vector<1x1x8x128xf32> to vector<8x128xf32>
    %482 = arith.maximumf %479, %481 : vector<8x128xf32>
    %c2_345 = arith.constant 2 : index
    %c9_346 = arith.constant 9 : index
    %c0_347 = arith.constant 0 : index
    %c0_348 = arith.constant 0 : index
    %483 = vector.load %arg2[%c2_345, %c9_346, %c0_347, %c0_348] : memref<3x13x8x128xf32, #tpu.memory_space<vmem>>, vector<1x1x8x128xf32>
    %484 = vector.shape_cast %483 : vector<1x1x8x128xf32> to vector<8x128xf32>
    %485 = arith.maximumf %482, %484 : vector<8x128xf32>
    %c2_349 = arith.constant 2 : index
    %c10_350 = arith.constant 10 : index
    %c0_351 = arith.constant 0 : index
    %c0_352 = arith.constant 0 : index
    %486 = vector.load %arg2[%c2_349, %c10_350, %c0_351, %c0_352] : memref<3x13x8x128xf32, #tpu.memory_space<vmem>>, vector<1x1x8x128xf32>
    %487 = vector.shape_cast %486 : vector<1x1x8x128xf32> to vector<8x128xf32>
    %488 = arith.maximumf %485, %487 : vector<8x128xf32>
    %c2_353 = arith.constant 2 : index
    %c11_354 = arith.constant 11 : index
    %c0_355 = arith.constant 0 : index
    %c0_356 = arith.constant 0 : index
    %489 = vector.load %arg2[%c2_353, %c11_354, %c0_355, %c0_356] : memref<3x13x8x128xf32, #tpu.memory_space<vmem>>, vector<1x1x8x128xf32>
    %490 = vector.shape_cast %489 : vector<1x1x8x128xf32> to vector<8x128xf32>
    %491 = arith.maximumf %488, %490 : vector<8x128xf32>
    %c2_357 = arith.constant 2 : index
    %c12_358 = arith.constant 12 : index
    %c0_359 = arith.constant 0 : index
    %c0_360 = arith.constant 0 : index
    %492 = vector.load %arg2[%c2_357, %c12_358, %c0_359, %c0_360] : memref<3x13x8x128xf32, #tpu.memory_space<vmem>>, vector<1x1x8x128xf32>
    %493 = vector.shape_cast %492 : vector<1x1x8x128xf32> to vector<8x128xf32>
    %494 = arith.maximumf %491, %493 : vector<8x128xf32>
    %c2_361 = arith.constant 2 : index
    %c5_362 = arith.constant 5 : index
    %c0_363 = arith.constant 0 : index
    %c0_364 = arith.constant 0 : index
    %495 = vector.load %arg3[%c2_361, %c5_362, %c0_363, %c0_364] : memref<3x6x8x128xf32, #tpu.memory_space<vmem>>, vector<1x1x8x128xf32>
    %496 = vector.shape_cast %495 : vector<1x1x8x128xf32> to vector<8x128xf32>
    %cst_365 = arith.constant 0.000000e+00 : f32
    %497 = vector.broadcast %cst_365 : f32 to vector<8x128xf32>
    %cst_366 = arith.constant 0.000000e+00 : f32
    %498 = vector.broadcast %cst_366 : f32 to vector<8x128xf32>
    %c2_367 = arith.constant 2 : index
    %c5_368 = arith.constant 5 : index
    %c0_369 = arith.constant 0 : index
    %c0_370 = arith.constant 0 : index
    %499 = vector.load %arg2[%c2_367, %c5_368, %c0_369, %c0_370] : memref<3x13x8x128xf32, #tpu.memory_space<vmem>>, vector<1x1x8x128xf32>
    %500 = vector.shape_cast %499 : vector<1x1x8x128xf32> to vector<8x128xf32>
    %501 = arith.subf %500, %494 : vector<8x128xf32>
    %502 = math.exp %501 : vector<8x128xf32>
    %503 = arith.addf %497, %502 : vector<8x128xf32>
    %cst_371 = arith.constant 0.000000e+00 : f32
    %504 = vector.broadcast %cst_371 : f32 to vector<8x128xf32>
    %505 = arith.cmpf oeq, %496, %504 : vector<8x128xf32>
    %cst_372 = arith.constant 0.000000e+00 : f32
    %506 = vector.broadcast %cst_372 : f32 to vector<8x128xf32>
    %507 = arith.select %505, %500, %506 : vector<8x128xi1>, vector<8x128xf32>
    %508 = arith.addf %498, %507 : vector<8x128xf32>
    %c2_373 = arith.constant 2 : index
    %c6_374 = arith.constant 6 : index
    %c0_375 = arith.constant 0 : index
    %c0_376 = arith.constant 0 : index
    %509 = vector.load %arg2[%c2_373, %c6_374, %c0_375, %c0_376] : memref<3x13x8x128xf32, #tpu.memory_space<vmem>>, vector<1x1x8x128xf32>
    %510 = vector.shape_cast %509 : vector<1x1x8x128xf32> to vector<8x128xf32>
    %511 = arith.subf %510, %494 : vector<8x128xf32>
    %512 = math.exp %511 : vector<8x128xf32>
    %513 = arith.addf %503, %512 : vector<8x128xf32>
    %cst_377 = arith.constant 1.000000e+00 : f32
    %514 = vector.broadcast %cst_377 : f32 to vector<8x128xf32>
    %515 = arith.cmpf oeq, %496, %514 : vector<8x128xf32>
    %cst_378 = arith.constant 0.000000e+00 : f32
    %516 = vector.broadcast %cst_378 : f32 to vector<8x128xf32>
    %517 = arith.select %515, %510, %516 : vector<8x128xi1>, vector<8x128xf32>
    %518 = arith.addf %508, %517 : vector<8x128xf32>
    %c2_379 = arith.constant 2 : index
    %c7_380 = arith.constant 7 : index
    %c0_381 = arith.constant 0 : index
    %c0_382 = arith.constant 0 : index
    %519 = vector.load %arg2[%c2_379, %c7_380, %c0_381, %c0_382] : memref<3x13x8x128xf32, #tpu.memory_space<vmem>>, vector<1x1x8x128xf32>
    %520 = vector.shape_cast %519 : vector<1x1x8x128xf32> to vector<8x128xf32>
    %521 = arith.subf %520, %494 : vector<8x128xf32>
    %522 = math.exp %521 : vector<8x128xf32>
    %523 = arith.addf %513, %522 : vector<8x128xf32>
    %cst_383 = arith.constant 2.000000e+00 : f32
    %524 = vector.broadcast %cst_383 : f32 to vector<8x128xf32>
    %525 = arith.cmpf oeq, %496, %524 : vector<8x128xf32>
    %cst_384 = arith.constant 0.000000e+00 : f32
    %526 = vector.broadcast %cst_384 : f32 to vector<8x128xf32>
    %527 = arith.select %525, %520, %526 : vector<8x128xi1>, vector<8x128xf32>
    %528 = arith.addf %518, %527 : vector<8x128xf32>
    %c2_385 = arith.constant 2 : index
    %c8_386 = arith.constant 8 : index
    %c0_387 = arith.constant 0 : index
    %c0_388 = arith.constant 0 : index
    %529 = vector.load %arg2[%c2_385, %c8_386, %c0_387, %c0_388] : memref<3x13x8x128xf32, #tpu.memory_space<vmem>>, vector<1x1x8x128xf32>
    %530 = vector.shape_cast %529 : vector<1x1x8x128xf32> to vector<8x128xf32>
    %531 = arith.subf %530, %494 : vector<8x128xf32>
    %532 = math.exp %531 : vector<8x128xf32>
    %533 = arith.addf %523, %532 : vector<8x128xf32>
    %cst_389 = arith.constant 3.000000e+00 : f32
    %534 = vector.broadcast %cst_389 : f32 to vector<8x128xf32>
    %535 = arith.cmpf oeq, %496, %534 : vector<8x128xf32>
    %cst_390 = arith.constant 0.000000e+00 : f32
    %536 = vector.broadcast %cst_390 : f32 to vector<8x128xf32>
    %537 = arith.select %535, %530, %536 : vector<8x128xi1>, vector<8x128xf32>
    %538 = arith.addf %528, %537 : vector<8x128xf32>
    %c2_391 = arith.constant 2 : index
    %c9_392 = arith.constant 9 : index
    %c0_393 = arith.constant 0 : index
    %c0_394 = arith.constant 0 : index
    %539 = vector.load %arg2[%c2_391, %c9_392, %c0_393, %c0_394] : memref<3x13x8x128xf32, #tpu.memory_space<vmem>>, vector<1x1x8x128xf32>
    %540 = vector.shape_cast %539 : vector<1x1x8x128xf32> to vector<8x128xf32>
    %541 = arith.subf %540, %494 : vector<8x128xf32>
    %542 = math.exp %541 : vector<8x128xf32>
    %543 = arith.addf %533, %542 : vector<8x128xf32>
    %cst_395 = arith.constant 4.000000e+00 : f32
    %544 = vector.broadcast %cst_395 : f32 to vector<8x128xf32>
    %545 = arith.cmpf oeq, %496, %544 : vector<8x128xf32>
    %cst_396 = arith.constant 0.000000e+00 : f32
    %546 = vector.broadcast %cst_396 : f32 to vector<8x128xf32>
    %547 = arith.select %545, %540, %546 : vector<8x128xi1>, vector<8x128xf32>
    %548 = arith.addf %538, %547 : vector<8x128xf32>
    %c2_397 = arith.constant 2 : index
    %c10_398 = arith.constant 10 : index
    %c0_399 = arith.constant 0 : index
    %c0_400 = arith.constant 0 : index
    %549 = vector.load %arg2[%c2_397, %c10_398, %c0_399, %c0_400] : memref<3x13x8x128xf32, #tpu.memory_space<vmem>>, vector<1x1x8x128xf32>
    %550 = vector.shape_cast %549 : vector<1x1x8x128xf32> to vector<8x128xf32>
    %551 = arith.subf %550, %494 : vector<8x128xf32>
    %552 = math.exp %551 : vector<8x128xf32>
    %553 = arith.addf %543, %552 : vector<8x128xf32>
    %cst_401 = arith.constant 5.000000e+00 : f32
    %554 = vector.broadcast %cst_401 : f32 to vector<8x128xf32>
    %555 = arith.cmpf oeq, %496, %554 : vector<8x128xf32>
    %cst_402 = arith.constant 0.000000e+00 : f32
    %556 = vector.broadcast %cst_402 : f32 to vector<8x128xf32>
    %557 = arith.select %555, %550, %556 : vector<8x128xi1>, vector<8x128xf32>
    %558 = arith.addf %548, %557 : vector<8x128xf32>
    %c2_403 = arith.constant 2 : index
    %c11_404 = arith.constant 11 : index
    %c0_405 = arith.constant 0 : index
    %c0_406 = arith.constant 0 : index
    %559 = vector.load %arg2[%c2_403, %c11_404, %c0_405, %c0_406] : memref<3x13x8x128xf32, #tpu.memory_space<vmem>>, vector<1x1x8x128xf32>
    %560 = vector.shape_cast %559 : vector<1x1x8x128xf32> to vector<8x128xf32>
    %561 = arith.subf %560, %494 : vector<8x128xf32>
    %562 = math.exp %561 : vector<8x128xf32>
    %563 = arith.addf %553, %562 : vector<8x128xf32>
    %cst_407 = arith.constant 6.000000e+00 : f32
    %564 = vector.broadcast %cst_407 : f32 to vector<8x128xf32>
    %565 = arith.cmpf oeq, %496, %564 : vector<8x128xf32>
    %cst_408 = arith.constant 0.000000e+00 : f32
    %566 = vector.broadcast %cst_408 : f32 to vector<8x128xf32>
    %567 = arith.select %565, %560, %566 : vector<8x128xi1>, vector<8x128xf32>
    %568 = arith.addf %558, %567 : vector<8x128xf32>
    %c2_409 = arith.constant 2 : index
    %c12_410 = arith.constant 12 : index
    %c0_411 = arith.constant 0 : index
    %c0_412 = arith.constant 0 : index
    %569 = vector.load %arg2[%c2_409, %c12_410, %c0_411, %c0_412] : memref<3x13x8x128xf32, #tpu.memory_space<vmem>>, vector<1x1x8x128xf32>
    %570 = vector.shape_cast %569 : vector<1x1x8x128xf32> to vector<8x128xf32>
    %571 = arith.subf %570, %494 : vector<8x128xf32>
    %572 = math.exp %571 : vector<8x128xf32>
    %573 = arith.addf %563, %572 : vector<8x128xf32>
    %cst_413 = arith.constant 7.000000e+00 : f32
    %574 = vector.broadcast %cst_413 : f32 to vector<8x128xf32>
    %575 = arith.cmpf oeq, %496, %574 : vector<8x128xf32>
    %cst_414 = arith.constant 0.000000e+00 : f32
    %576 = vector.broadcast %cst_414 : f32 to vector<8x128xf32>
    %577 = arith.select %575, %570, %576 : vector<8x128xi1>, vector<8x128xf32>
    %578 = arith.addf %568, %577 : vector<8x128xf32>
    %579 = math.log %573 : vector<8x128xf32>
    %580 = arith.addf %494, %579 : vector<8x128xf32>
    %581 = arith.subf %580, %578 : vector<8x128xf32>
    %cst_415 = arith.constant 0.000000e+00 : f32
    %582 = vector.broadcast %cst_415 : f32 to vector<8x128xf32>
    %583 = arith.select %400, %581, %582 : vector<8x128xi1>, vector<8x128xf32>
    %584 = arith.addf %390, %583 : vector<8x128xf32>
    %585 = arith.extui %400 : vector<8x128xi1> to vector<8x128xi32>
    %586 = arith.sitofp %585 : vector<8x128xi32> to vector<8x128xf32>
    %587 = arith.addf %393, %586 : vector<8x128xf32>
    %588 = arith.extui %402 : vector<8x128xi1> to vector<8x128xi32>
    %589 = arith.sitofp %588 : vector<8x128xi32> to vector<8x128xf32>
    %590 = arith.addf %396, %589 : vector<8x128xf32>
    %c0_416 = arith.constant 0 : index
    %c0_417 = arith.constant 0 : index
    %c0_418 = arith.constant 0 : index
    %c0_419 = arith.constant 0 : index
    %591 = vector.load %arg5[%c0_416, %c0_417, %c0_418, %c0_419] : memref<1x6x8x128xf32, #tpu.memory_space<vmem>>, vector<1x1x8x128xf32>
    %592 = vector.shape_cast %591 : vector<1x1x8x128xf32> to vector<8x128xf32>
    %593 = arith.addf %592, %587 : vector<8x128xf32>
    %c0_420 = arith.constant 0 : index
    %c0_421 = arith.constant 0 : index
    %c0_422 = arith.constant 0 : index
    %c0_423 = arith.constant 0 : index
    %594 = vector.load %arg5[%c0_420, %c0_421, %c0_422, %c0_423] : memref<1x6x8x128xf32, #tpu.memory_space<vmem>>, vector<1x1x8x128xf32>
    %595 = vector.shape_cast %594 : vector<1x1x8x128xf32> to vector<8x128xf32>
    %596 = vector.shape_cast %593 : vector<8x128xf32> to vector<1x1x8x128xf32>
    tpu.vector_store %arg5[%c0_420, %c0_421, %c0_422, %c0_423], %596 {strides = array<i32>} : memref<1x6x8x128xf32, #tpu.memory_space<vmem>>, vector<1x1x8x128xf32>,
    %c0_424 = arith.constant 0 : index
    %c1_425 = arith.constant 1 : index
    %c0_426 = arith.constant 0 : index
    %c0_427 = arith.constant 0 : index
    %597 = vector.load %arg5[%c0_424, %c1_425, %c0_426, %c0_427] : memref<1x6x8x128xf32, #tpu.memory_space<vmem>>, vector<1x1x8x128xf32>
    %598 = vector.shape_cast %597 : vector<1x1x8x128xf32> to vector<8x128xf32>
    %599 = arith.addf %598, %590 : vector<8x128xf32>
    %c0_428 = arith.constant 0 : index
    %c1_429 = arith.constant 1 : index
    %c0_430 = arith.constant 0 : index
    %c0_431 = arith.constant 0 : index
    %600 = vector.load %arg5[%c0_428, %c1_429, %c0_430, %c0_431] : memref<1x6x8x128xf32, #tpu.memory_space<vmem>>, vector<1x1x8x128xf32>
    %601 = vector.shape_cast %600 : vector<1x1x8x128xf32> to vector<8x128xf32>
    %602 = vector.shape_cast %599 : vector<8x128xf32> to vector<1x1x8x128xf32>
    tpu.vector_store %arg5[%c0_428, %c1_429, %c0_430, %c0_431], %602 {strides = array<i32>} : memref<1x6x8x128xf32, #tpu.memory_space<vmem>>, vector<1x1x8x128xf32>,
    %c0_432 = arith.constant 0 : index
    %c2_433 = arith.constant 2 : index
    %c0_434 = arith.constant 0 : index
    %c0_435 = arith.constant 0 : index
    %603 = vector.load %arg5[%c0_432, %c2_433, %c0_434, %c0_435] : memref<1x6x8x128xf32, #tpu.memory_space<vmem>>, vector<1x1x8x128xf32>
    %604 = vector.shape_cast %603 : vector<1x1x8x128xf32> to vector<8x128xf32>
    %605 = arith.addf %604, %471 : vector<8x128xf32>
    %c0_436 = arith.constant 0 : index
    %c2_437 = arith.constant 2 : index
    %c0_438 = arith.constant 0 : index
    %c0_439 = arith.constant 0 : index
    %606 = vector.load %arg5[%c0_436, %c2_437, %c0_438, %c0_439] : memref<1x6x8x128xf32, #tpu.memory_space<vmem>>, vector<1x1x8x128xf32>
    %607 = vector.shape_cast %606 : vector<1x1x8x128xf32> to vector<8x128xf32>
    %608 = vector.shape_cast %605 : vector<8x128xf32> to vector<1x1x8x128xf32>
    tpu.vector_store %arg5[%c0_436, %c2_437, %c0_438, %c0_439], %608 {strides = array<i32>} : memref<1x6x8x128xf32, #tpu.memory_space<vmem>>, vector<1x1x8x128xf32>,
    %c0_440 = arith.constant 0 : index
    %c3_441 = arith.constant 3 : index
    %c0_442 = arith.constant 0 : index
    %c0_443 = arith.constant 0 : index
    %609 = vector.load %arg5[%c0_440, %c3_441, %c0_442, %c0_443] : memref<1x6x8x128xf32, #tpu.memory_space<vmem>>, vector<1x1x8x128xf32>
    %610 = vector.shape_cast %609 : vector<1x1x8x128xf32> to vector<8x128xf32>
    %611 = arith.addf %610, %416 : vector<8x128xf32>
    %c0_444 = arith.constant 0 : index
    %c3_445 = arith.constant 3 : index
    %c0_446 = arith.constant 0 : index
    %c0_447 = arith.constant 0 : index
    %612 = vector.load %arg5[%c0_444, %c3_445, %c0_446, %c0_447] : memref<1x6x8x128xf32, #tpu.memory_space<vmem>>, vector<1x1x8x128xf32>
    %613 = vector.shape_cast %612 : vector<1x1x8x128xf32> to vector<8x128xf32>
    %614 = vector.shape_cast %611 : vector<8x128xf32> to vector<1x1x8x128xf32>
    tpu.vector_store %arg5[%c0_444, %c3_445, %c0_446, %c0_447], %614 {strides = array<i32>} : memref<1x6x8x128xf32, #tpu.memory_space<vmem>>, vector<1x1x8x128xf32>,
    %c0_448 = arith.constant 0 : index
    %c4_449 = arith.constant 4 : index
    %c0_450 = arith.constant 0 : index
    %c0_451 = arith.constant 0 : index
    %615 = vector.load %arg5[%c0_448, %c4_449, %c0_450, %c0_451] : memref<1x6x8x128xf32, #tpu.memory_space<vmem>>, vector<1x1x8x128xf32>
    %616 = vector.shape_cast %615 : vector<1x1x8x128xf32> to vector<8x128xf32>
    %617 = arith.addf %616, %421 : vector<8x128xf32>
    %c0_452 = arith.constant 0 : index
    %c4_453 = arith.constant 4 : index
    %c0_454 = arith.constant 0 : index
    %c0_455 = arith.constant 0 : index
    %618 = vector.load %arg5[%c0_452, %c4_453, %c0_454, %c0_455] : memref<1x6x8x128xf32, #tpu.memory_space<vmem>>, vector<1x1x8x128xf32>
    %619 = vector.shape_cast %618 : vector<1x1x8x128xf32> to vector<8x128xf32>
    %620 = vector.shape_cast %617 : vector<8x128xf32> to vector<1x1x8x128xf32>
    tpu.vector_store %arg5[%c0_452, %c4_453, %c0_454, %c0_455], %620 {strides = array<i32>} : memref<1x6x8x128xf32, #tpu.memory_space<vmem>>, vector<1x1x8x128xf32>,
    %c0_456 = arith.constant 0 : index
    %c5_457 = arith.constant 5 : index
    %c0_458 = arith.constant 0 : index
    %c0_459 = arith.constant 0 : index
    %621 = vector.load %arg5[%c0_456, %c5_457, %c0_458, %c0_459] : memref<1x6x8x128xf32, #tpu.memory_space<vmem>>, vector<1x1x8x128xf32>
    %622 = vector.shape_cast %621 : vector<1x1x8x128xf32> to vector<8x128xf32>
    %623 = arith.addf %622, %584 : vector<8x128xf32>
    %c0_460 = arith.constant 0 : index
    %c5_461 = arith.constant 5 : index
    %c0_462 = arith.constant 0 : index
    %c0_463 = arith.constant 0 : index
    %624 = vector.load %arg5[%c0_460, %c5_461, %c0_462, %c0_463] : memref<1x6x8x128xf32, #tpu.memory_space<vmem>>, vector<1x1x8x128xf32>
    %625 = vector.shape_cast %624 : vector<1x1x8x128xf32> to vector<8x128xf32>
    %626 = vector.shape_cast %623 : vector<8x128xf32> to vector<1x1x8x128xf32>
    tpu.vector_store %arg5[%c0_460, %c5_461, %c0_462, %c0_463], %626 {strides = array<i32>} : memref<1x6x8x128xf32, #tpu.memory_space<vmem>>, vector<1x1x8x128xf32>,
    return
  }
  func.func @transform_0(%arg0: i32, %arg1: i32) -> (i32, i32, i32, i32) {
    %c1_i32 = arith.constant 1 : i32
    %0 = arith.muli %arg0, %c1_i32 : i32
    %1 = arith.addi %0, %arg1 : i32
    %c0_i32 = arith.constant 0 : i32
    %c0_i32_0 = arith.constant 0 : i32
    %c0_i32_1 = arith.constant 0 : i32
    %c0_i32_2 = arith.constant 0 : i32
    return %c0_i32, %c0_i32_0, %1, %c0_i32_1 : i32, i32, i32, i32
  }
  func.func @transform_1(%arg0: i32, %arg1: i32) -> (i32, i32, i32, i32) {
    %c1_i32 = arith.constant 1 : i32
    %0 = arith.muli %arg0, %c1_i32 : i32
    %1 = arith.addi %0, %arg1 : i32
    %c0_i32 = arith.constant 0 : i32
    %c0_i32_0 = arith.constant 0 : i32
    %c0_i32_1 = arith.constant 0 : i32
    %c0_i32_2 = arith.constant 0 : i32
    return %c0_i32, %c0_i32_0, %1, %c0_i32_1 : i32, i32, i32, i32
  }
  func.func @transform_2(%arg0: i32, %arg1: i32) -> (i32, i32) {
    %c0_i32 = arith.constant 0 : i32
    %c0_i32_0 = arith.constant 0 : i32
    %c0_i32_1 = arith.constant 0 : i32
    return %c0_i32, %c0_i32_0 : i32, i32
  }
  func.func @transform_3(%arg0: i32, %arg1: i32) -> (i32, i32, i32, i32) {
    %c0_i32 = arith.constant 0 : i32
    %c0_i32_0 = arith.constant 0 : i32
    %c0_i32_1 = arith.constant 0 : i32
    %c0_i32_2 = arith.constant 0 : i32
    return %arg0, %c0_i32, %c0_i32_0, %c0_i32_1 : i32, i32, i32, i32
  }
}

</mosaic_0001>

<llo_original>
// kernel: tpu_custom_call.1
$region0: #{tpu_custom_call.1}
  #allocation0 [shape = 'u32[]', space=smem, size = 0x4, offset = 0x4, fixed_abs, tag = 'smem constant byte address 0x4 - core index']
  #allocation1 [shape = 'u32[72,128]{1,0:T(1,128)}', space=vmem, size = 0x9000, scoped, tag = 'internal scratch']
  %s0 = inlined_call_operand.hbm [shape: f32[3,13,8,128], index: 0, kind: input, shape index: {}]
  %s1 = inlined_call_operand.hbm [shape: f32[3,6,8,128], index: 1, kind: input, shape index: {}]
  %s2 = inlined_call_operand.vmem [shape: f32[3,2], index: 2, kind: input, shape index: {}]
  %s3 = inlined_call_operand.hbm [shape: f32[1,6,8,128], index: 3, kind: output, shape index: {}]
  %s4 = sld [smem:[#allocation0]]
  $region38: #{tpu_custom_call.1} parent=0
    _
  %s6 = ssub.s32 1, %s4
  %s7 = scalar_select 0, %s6, %s4
  $region1: #{tpu_custom_call.1} parent=0
    #allocation2 [shape = 'u8[159744]{0}', space=vmem, size = 0x27000, scoped, tag = 'input window, operand 0, single buffered']
    #allocation3 [shape = 's32[1]{0}', space=sflag, size = 0x4, scoped, tag = 'scoped memory for tpu_custom_call.1']
    #allocation4 [shape = 's32[1]{0}', space=sflag, size = 0x4, scoped, tag = 'scoped memory for tpu_custom_call.1']
    #allocation5 [shape = 's32[1]{0}', space=sflag, size = 0x4, scoped, tag = 'scoped memory for tpu_custom_call.1']
    #allocation6 [shape = 'u8[73728]{0}', space=vmem, size = 0x12000, scoped, tag = 'input window, operand 1, single buffered']
    #allocation7 [shape = 's32[1]{0}', space=sflag, size = 0x4, scoped, tag = 'scoped memory for tpu_custom_call.1']
    #allocation8 [shape = 'u8[2048]{0}', space=smem, size = 0x800, scoped, tag = 'input window, operand 2, single buffered']
    #allocation9 [shape = 'u8[24576]{0}', space=vmem, size = 0x6000, scoped, tag = 'output window, operand 0, single buffered']
    %8 = vsyncpa [#allocation3], 0
    %9 = vsyncpa [#allocation7], 0
    %10 = vsyncpa [#allocation5], 0
    %11 = vsyncpa [#allocation4], 0
    // Predicated region
    $region2: #{tpu_custom_call.1} parent=1 // pred_check
      _
    $region3: #{tpu_custom_call.1} parent=1 // pred_check_branch
      %13 = sbr.rel (0) target = $region5
    $region4: #{tpu_custom_call.1} parent=1 // pred_region
      %s14 = sadd.s32 0, 0
      %16 = vsyncadd [#allocation3], 0
      %s17 = smul.addr %s14, 8
      %s18 = scalar_lea.hbm %s0, %s17
      %s19 = sshll.u32 %s18, 4
      %s20 = int_to_ptr.hbm [resolvable:$true] %s19
      %s21 = sshll.u32 [#allocation2], 4
      %s22 = int_to_ptr.vmem [resolvable:$true] %s21
      %27 = dma.hbm_to_vmem [thread:$0]  %s20, 4992, %s22, [#allocation3], 128, 128, 8
    $region5: #{tpu_custom_call.1} parent=1 // pred_fallthru
      _
    // Predicated region
    $region6: #{tpu_custom_call.1} parent=1 // pred_check
      _
    $region7: #{tpu_custom_call.1} parent=1 // pred_check_branch
      %29 = sbr.rel (0) target = $region9
    $region8: #{tpu_custom_call.1} parent=1 // pred_region
      %s30 = sadd.s32 0, 0
      %32 = vsyncadd [#allocation7], 0
      %s33 = smul.addr %s30, 8
      %s34 = scalar_lea.hbm %s1, %s33
      %s35 = sshll.u32 %s34, 4
      %s36 = int_to_ptr.hbm [resolvable:$true] %s35
      %s37 = sshll.u32 [#allocation6], 4
      %s38 = int_to_ptr.vmem [resolvable:$true] %s37
      %43 = dma.hbm_to_vmem [thread:$0]  %s36, 2304, %s38, [#allocation7], 128, 128, 8
    $region9: #{tpu_custom_call.1} parent=1 // pred_fallthru
      _
    // Predicated region
    $region10: #{tpu_custom_call.1} parent=1 // pred_check
      _
    $region11: #{tpu_custom_call.1} parent=1 // pred_check_branch
      %45 = sbr.rel (0) target = $region13
    $region12: #{tpu_custom_call.1} parent=1 // pred_region
      %47 = vsyncadd [#allocation5], 0
      %s49 = sshll.u32 %s2, 4
      %s50 = int_to_ptr.vmem [resolvable:$true] %s49
      %52 = dma.vmem_to_smem %s50, 64, [#allocation8], [#allocation5]
    $region13: #{tpu_custom_call.1} parent=1 // pred_fallthru
      _
    // Predicated region
    $region14: #{tpu_custom_call.1} parent=1 // pred_check
      _
    $region15: #{tpu_custom_call.1} parent=1 // pred_check_branch
      %54 = sbr.rel (0) target = $region17
    $region16: #{tpu_custom_call.1} parent=1 // pred_region
      %56 = dma.done [#allocation3], 4992
    $region17: #{tpu_custom_call.1} parent=1 // pred_fallthru
      _
    // Predicated region
    $region18: #{tpu_custom_call.1} parent=1 // pred_check
      _
    $region19: #{tpu_custom_call.1} parent=1 // pred_check_branch
      %58 = sbr.rel (0) target = $region21
    $region20: #{tpu_custom_call.1} parent=1 // pred_region
      %60 = dma.done [#allocation7], 2304
    $region21: #{tpu_custom_call.1} parent=1 // pred_fallthru
      _
    // Predicated region
    $region22: #{tpu_custom_call.1} parent=1 // pred_check
      _
    $region23: #{tpu_custom_call.1} parent=1 // pred_check_branch
      %62 = sbr.rel (0) target = $region25
    $region24: #{tpu_custom_call.1} parent=1 // pred_region
      %64 = dma.done [#allocation5], 64
    $region25: #{tpu_custom_call.1} parent=1 // pred_fallthru
      _
    %65 = sfence
    %s66 = sadd.s32 0, 0
    %s67 = sadd.s32 0, 0
    %p68 = scmp.eq.s32.totalorder 0, 0
    // Predicated region
    $region26: #{tpu_custom_call.1} parent=1 // pred_check
      %p69 = pneg %p68
    $region27: #{tpu_custom_call.1} parent=1 // pred_check_branch
      %71 = sbr.rel (%p69) target = $region29
    $region28: #{tpu_custom_call.1} parent=1 // pred_region
      %72 = vst [vmem:[#allocation9] sm:$0xff] 0.0
      %73 = vst [vmem:[#allocation9 + $0x8] sm:$0xff] 0.0
      %74 = vst [vmem:[#allocation9 + $0x10] sm:$0xff] 0.0
      %75 = vst [vmem:[#allocation9 + $0x18] sm:$0xff] 0.0
      %76 = vst [vmem:[#allocation9 + $0x20] sm:$0xff] 0.0
      %77 = vst [vmem:[#allocation9 + $0x28] sm:$0xff] 0.0
    $region29: #{tpu_custom_call.1} parent=1 // pred_fallthru
      _
    %v78 = vld [vmem:[#allocation6] sm:$0xff]
    %vm79 = vcmp.eq.f32.partialorder %v78, 1.0
    %vm80 = vcmp.eq.f32.partialorder %v78, 0.0
    %v81 = vld [vmem:[#allocation2] sm:$0xff]
    %v82 = vxor.u32 %v81, 2147483648
    %v83 = vmul.f32 %v82, 1.442695
    %v84 = vpow.pop %v83
    %v85 = vadd.f32 %v84, 1.0
    %v86 = vrcp.pop %v85
    %v87 = vmul.f32 %v85, %v86
    %v88 = vsub.f32 1.0, %v87
    %v89 = vmul.f32 %v86, %v88
    %v90 = vadd.f32 %v86, %v89
    %vm91 = vweird.f32 %v85
    %vm92 = vweird.f32 %v86
    %vm93 = vmor %vm91, %vm92
    %v94 = vsel %vm93, %v86, %v90
    %v95 = vand.u32 2147483647, %v85
    %vm96 = vcmp.eq.f32.partialorder %v95, 8.507059e+37
    %v97 = vand.u32 %v85, 2147483648
    %v98 = vor.u32 1.1754944e-38, %v97
    %v99 = vsel %vm96, %v98, %v94
    %v100 = vmul.f32 1.0, %v99
    %v101 = vsub.f32 0.0, %v100
    %v102 = vmul.f32 %v101, 1.442695
    %v103 = vpow.pop %v102
    %v104 = vadd.f32 %v103, 1.0
    %v105 = vlog2.pop %v104
    %v106 = vmul.f32 %v105, 0.6931472
    %v107 = vmul.f32 -0.5, %v103
    %v108 = vadd.f32 %v107, 1.0
    %v109 = vmul.f32 %v108, %v103
    %v110 = vand.u32 2147483647, %v103
    %vm111 = vcmp.lt.f32.partialorder %v110, 0.0004427343
    %v112 = vsel %vm111, %v109, %v106
    %v113 = vsel %vm79, %v112, 0.0
    %v114 = vadd.f32 %v113, 0.0
    %v115 = vmul.f32 %v100, 1.442695
    %v116 = vpow.pop %v115
    %v117 = vadd.f32 %v116, 1.0
    %v118 = vlog2.pop %v117
    %v119 = vmul.f32 %v118, 0.6931472
    %v120 = vmul.f32 -0.5, %v116
    %v121 = vadd.f32 %v120, 1.0
    %v122 = vmul.f32 %v121, %v116
    %v123 = vand.u32 2147483647, %v116
    %vm124 = vcmp.lt.f32.partialorder %v123, 0.0004427343
    %v125 = vsel %vm124, %v122, %v119
    %v126 = vsel %vm80, %v125, 0.0
    %v127 = vadd.f32 %v126, 0.0
    %s128 = scalar_lea.vmem [#allocation2], 8
    %v129 = vld [vmem:[%s128] sm:$0xff]
    %v130 = vxor.u32 %v129, 2147483648
    %v131 = vmul.f32 %v130, 1.442695
    %v132 = vpow.pop %v131
    %v133 = vadd.f32 %v132, 1.0
    %v134 = vrcp.pop %v133
    %v135 = vmul.f32 %v133, %v134
    %v136 = vsub.f32 1.0, %v135
    %v137 = vmul.f32 %v134, %v136
    %v138 = vadd.f32 %v134, %v137
    %vm139 = vweird.f32 %v133
    %vm140 = vweird.f32 %v134
    %vm141 = vmor %vm139, %vm140
    %v142 = vsel %vm141, %v134, %v138
    %v143 = vand.u32 2147483647, %v133
    %vm144 = vcmp.eq.f32.partialorder %v143, 8.507059e+37
    %v145 = vand.u32 %v133, 2147483648
    %v146 = vor.u32 1.1754944e-38, %v145
    %v147 = vsel %vm144, %v146, %v142
    %v148 = vmul.f32 1.0, %v147
    %s149 = scalar_lea.vmem [#allocation6], 8
    %v150 = vld [vmem:[%s149] sm:$0xff]
    %v151 = vsub.f32 %v148, %v150
    %v152 = vmul.f32 %v151, %v151
    %v153 = vadd.f32 %v152, 0.0
    %s154 = scalar_lea.vmem [#allocation2], 16
    %v155 = vld [vmem:[%s154] sm:$0xff]
    %v156 = vxor.u32 %v155, 2147483648
    %v157 = vmul.f32 %v156, 1.442695
    %v158 = vpow.pop %v157
    %v159 = vadd.f32 %v158, 1.0
    %v160 = vrcp.pop %v159
    %v161 = vmul.f32 %v159, %v160
    %v162 = vsub.f32 1.0, %v161
    %v163 = vmul.f32 %v160, %v162
    %v164 = vadd.f32 %v160, %v163
    %vm165 = vweird.f32 %v159
    %vm166 = vweird.f32 %v160
    %vm167 = vmor %vm165, %vm166
    %v168 = vsel %vm167, %v160, %v164
    %v169 = vand.u32 2147483647, %v159
    %vm170 = vcmp.eq.f32.partialorder %v169, 8.507059e+37
    %v171 = vand.u32 %v159, 2147483648
    %v172 = vor.u32 1.1754944e-38, %v171
    %v173 = vsel %vm170, %v172, %v168
    %v174 = vmul.f32 1.0, %v173
    %s175 = scalar_lea.vmem [#allocation6], 16
    %v176 = vld [vmem:[%s175] sm:$0xff]
    %v177 = vsub.f32 %v174, %v176
    %v178 = vmul.f32 %v177, %v177
    %v179 = vadd.f32 %v153, %v178
    %s180 = scalar_lea.vmem [#allocation2], 24
    %v181 = vld [vmem:[%s180] sm:$0xff]
    %v182 = vmul.f32 %v181, 1.442695
    %v183 = vpow.pop %v182
    %s184 = sld [smem:[#allocation8]]
    %v185 = vstv %s184
    %v186 = vmul.f32 %v183, %v185
    %s187 = scalar_lea.vmem [#allocation6], 24
    %v188 = vld [vmem:[%s187] sm:$0xff]
    %v189 = vsub.f32 %v186, %v188
    %v190 = vmul.f32 %v189, %v189
    %v191 = vadd.f32 %v179, %v190
    %s192 = scalar_lea.vmem [#allocation2], 32
    %v193 = vld [vmem:[%s192] sm:$0xff]
    %v194 = vmul.f32 %v193, 1.442695
    %v195 = vpow.pop %v194
    %s196 = sld [smem:[#allocation8 + $0x1]]
    %v197 = vstv %s196
    %v198 = vmul.f32 %v195, %v197
    %s199 = scalar_lea.vmem [#allocation6], 32
    %v200 = vld [vmem:[%s199] sm:$0xff]
    %v201 = vsub.f32 %v198, %v200
    %v202 = vmul.f32 %v201, %v201
    %v203 = vadd.f32 %v191, %v202
    %v204 = vsel %vm79, %v203, 0.0
    %v205 = vadd.f32 %v204, 0.0
    %s206 = scalar_lea.vmem [#allocation2], 40
    %v207 = vld [vmem:[%s206] sm:$0xff]
    %s208 = scalar_lea.vmem [#allocation2], 48
    %v209 = vld [vmem:[%s208] sm:$0xff]
    %v210 = vmax.f32 %v207, %v209
    %s211 = scalar_lea.vmem [#allocation2], 56
    %v212 = vld [vmem:[%s211] sm:$0xff]
    %v213 = vmax.f32 %v210, %v212
    %s214 = scalar_lea.vmem [#allocation2], 64
    %v215 = vld [vmem:[%s214] sm:$0xff]
    %v216 = vmax.f32 %v213, %v215
    %s217 = scalar_lea.vmem [#allocation2], 72
    %v218 = vld [vmem:[%s217] sm:$0xff]
    %v219 = vmax.f32 %v216, %v218
    %s220 = scalar_lea.vmem [#allocation2], 80
    %v221 = vld [vmem:[%s220] sm:$0xff]
    %v222 = vmax.f32 %v219, %v221
    %s223 = scalar_lea.vmem [#allocation2], 88
    %v224 = vld [vmem:[%s223] sm:$0xff]
    %v225 = vmax.f32 %v222, %v224
    %s226 = scalar_lea.vmem [#allocation2], 96
    %v227 = vld [vmem:[%s226] sm:$0xff]
    %v228 = vmax.f32 %v225, %v227
    %s229 = scalar_lea.vmem [#allocation6], 40
    %v230 = vld [vmem:[%s229] sm:$0xff]
    %v231 = vsub.f32 %v207, %v228
    %v232 = vmul.f32 %v231, 1.442695
    %v233 = vpow.pop %v232
    %v234 = vadd.f32 %v233, 0.0
    %vm235 = vcmp.eq.f32.partialorder %v230, 0.0
    %v236 = vsel %vm235, %v207, 0.0
    %v237 = vadd.f32 %v236, 0.0
    %v238 = vsub.f32 %v209, %v228
    %v239 = vmul.f32 %v238, 1.442695
    %v240 = vpow.pop %v239
    %v241 = vadd.f32 %v234, %v240
    %vm242 = vcmp.eq.f32.partialorder %v230, 1.0
    %v243 = vsel %vm242, %v209, 0.0
    %v244 = vadd.f32 %v237, %v243
    %v245 = vsub.f32 %v212, %v228
    %v246 = vmul.f32 %v245, 1.442695
    %v247 = vpow.pop %v246
    %v248 = vadd.f32 %v241, %v247
    %vm249 = vcmp.eq.f32.partialorder %v230, 2.0
    %v250 = vsel %vm249, %v212, 0.0
    %v251 = vadd.f32 %v244, %v250
    %v252 = vsub.f32 %v215, %v228
    %v253 = vmul.f32 %v252, 1.442695
    %v254 = vpow.pop %v253
    %v255 = vadd.f32 %v248, %v254
    %vm256 = vcmp.eq.f32.partialorder %v230, 3.0
    %v257 = vsel %vm256, %v215, 0.0
    %v258 = vadd.f32 %v251, %v257
    %v259 = vsub.f32 %v218, %v228
    %v260 = vmul.f32 %v259, 1.442695
    %v261 = vpow.pop %v260
    %v262 = vadd.f32 %v255, %v261
    %vm263 = vcmp.eq.f32.partialorder %v230, 4.0
    %v264 = vsel %vm263, %v218, 0.0
    %v265 = vadd.f32 %v258, %v264
    %v266 = vsub.f32 %v221, %v228
    %v267 = vmul.f32 %v266, 1.442695
    %v268 = vpow.pop %v267
    %v269 = vadd.f32 %v262, %v268
    %vm270 = vcmp.eq.f32.partialorder %v230, 5.0
    %v271 = vsel %vm270, %v221, 0.0
    %v272 = vadd.f32 %v265, %v271
    %v273 = vsub.f32 %v224, %v228
    %v274 = vmul.f32 %v273, 1.442695
    %v275 = vpow.pop %v274
    %v276 = vadd.f32 %v269, %v275
    %vm277 = vcmp.eq.f32.partialorder %v230, 6.0
    %v278 = vsel %vm277, %v224, 0.0
    %v279 = vadd.f32 %v272, %v278
    %v280 = vsub.f32 %v227, %v228
    %v281 = vmul.f32 %v280, 1.442695
    %v282 = vpow.pop %v281
    %v283 = vadd.f32 %v276, %v282
    %vm284 = vcmp.eq.f32.partialorder %v230, 7.0
    %v285 = vsel %vm284, %v227, 0.0
    %v286 = vadd.f32 %v279, %v285
    %v287 = vlog2.pop %v283
    %v288 = vmul.f32 %v287, 0.6931472
    %v289 = vadd.f32 %v228, %v288
    %v290 = vsub.f32 %v289, %v286
    %v291 = vsel %vm79, %v290, 0.0
    %v292 = vadd.f32 %v291, 0.0
    %v293 = vsel %vm79, 1, 0
    %v294 = vcvt.s32.f32 %v293
    %v295 = vadd.f32 %v294, 0.0
    %v296 = vsel %vm80, 1, 0
    %v297 = vcvt.s32.f32 %v296
    %v298 = vadd.f32 %v297, 0.0
    %s299 = scalar_lea.vmem [#allocation6], 48
    %v300 = vld [vmem:[%s299] sm:$0xff]
    %vm301 = vcmp.eq.f32.partialorder %v300, 1.0
    %vm302 = vcmp.eq.f32.partialorder %v300, 0.0
    %s303 = scalar_lea.vmem [#allocation2], 104
    %v304 = vld [vmem:[%s303] sm:$0xff]
    %v305 = vxor.u32 %v304, 2147483648
    %v306 = vmul.f32 %v305, 1.442695
    %v307 = vpow.pop %v306
    %v308 = vadd.f32 %v307, 1.0
    %v309 = vrcp.pop %v308
    %v310 = vmul.f32 %v308, %v309
    %v311 = vsub.f32 1.0, %v310
    %v312 = vmul.f32 %v309, %v311
    %v313 = vadd.f32 %v309, %v312
    %vm314 = vweird.f32 %v308
    %vm315 = vweird.f32 %v309
    %vm316 = vmor %vm314, %vm315
    %v317 = vsel %vm316, %v309, %v313
    %v318 = vand.u32 2147483647, %v308
    %vm319 = vcmp.eq.f32.partialorder %v318, 8.507059e+37
    %v320 = vand.u32 %v308, 2147483648
    %v321 = vor.u32 1.1754944e-38, %v320
    %v322 = vsel %vm319, %v321, %v317
    %v323 = vmul.f32 1.0, %v322
    %v324 = vsub.f32 0.0, %v323
    %v325 = vmul.f32 %v324, 1.442695
    %v326 = vpow.pop %v325
    %v327 = vadd.f32 %v326, 1.0
    %v328 = vlog2.pop %v327
    %v329 = vmul.f32 %v328, 0.6931472
    %v330 = vmul.f32 -0.5, %v326
    %v331 = vadd.f32 %v330, 1.0
    %v332 = vmul.f32 %v331, %v326
    %v333 = vand.u32 2147483647, %v326
    %vm334 = vcmp.lt.f32.partialorder %v333, 0.0004427343
    %v335 = vsel %vm334, %v332, %v329
    %v336 = vsel %vm301, %v335, 0.0
    %v337 = vadd.f32 %v114, %v336
    %v338 = vmul.f32 %v323, 1.442695
    %v339 = vpow.pop %v338
    %v340 = vadd.f32 %v339, 1.0
    %v341 = vlog2.pop %v340
    %v342 = vmul.f32 %v341, 0.6931472
    %v343 = vmul.f32 -0.5, %v339
    %v344 = vadd.f32 %v343, 1.0
    %v345 = vmul.f32 %v344, %v339
    %v346 = vand.u32 2147483647, %v339
    %vm347 = vcmp.lt.f32.partialorder %v346, 0.0004427343
    %v348 = vsel %vm347, %v345, %v342
    %v349 = vsel %vm302, %v348, 0.0
    %v350 = vadd.f32 %v127, %v349
    %s351 = scalar_lea.vmem [#allocation2], 112
    %v352 = vld [vmem:[%s351] sm:$0xff]
    %v353 = vxor.u32 %v352, 2147483648
    %v354 = vmul.f32 %v353, 1.442695
    %v355 = vpow.pop %v354
    %v356 = vadd.f32 %v355, 1.0
    %v357 = vrcp.pop %v356
    %v358 = vmul.f32 %v356, %v357
    %v359 = vsub.f32 1.0, %v358
    %v360 = vmul.f32 %v357, %v359
    %v361 = vadd.f32 %v357, %v360
    %vm362 = vweird.f32 %v356
    %vm363 = vweird.f32 %v357
    %vm364 = vmor %vm362, %vm363
    %v365 = vsel %vm364, %v357, %v361
    %v366 = vand.u32 2147483647, %v356
    %vm367 = vcmp.eq.f32.partialorder %v366, 8.507059e+37
    %v368 = vand.u32 %v356, 2147483648
    %v369 = vor.u32 1.1754944e-38, %v368
    %v370 = vsel %vm367, %v369, %v365
    %v371 = vmul.f32 1.0, %v370
    %s372 = scalar_lea.vmem [#allocation6], 56
    %v373 = vld [vmem:[%s372] sm:$0xff]
    %v374 = vsub.f32 %v371, %v373
    %v375 = vmul.f32 %v374, %v374
    %v376 = vadd.f32 %v375, 0.0
    %s377 = scalar_lea.vmem [#allocation2], 120
    %v378 = vld [vmem:[%s377] sm:$0xff]
    %v379 = vxor.u32 %v378, 2147483648
    %v380 = vmul.f32 %v379, 1.442695
    %v381 = vpow.pop %v380
    %v382 = vadd.f32 %v381, 1.0
    %v383 = vrcp.pop %v382
    %v384 = vmul.f32 %v382, %v383
    %v385 = vsub.f32 1.0, %v384
    %v386 = vmul.f32 %v383, %v385
    %v387 = vadd.f32 %v383, %v386
    %vm388 = vweird.f32 %v382
    %vm389 = vweird.f32 %v383
    %vm390 = vmor %vm388, %vm389
    %v391 = vsel %vm390, %v383, %v387
    %v392 = vand.u32 2147483647, %v382
    %vm393 = vcmp.eq.f32.partialorder %v392, 8.507059e+37
    %v394 = vand.u32 %v382, 2147483648
    %v395 = vor.u32 1.1754944e-38, %v394
    %v396 = vsel %vm393, %v395, %v391
    %v397 = vmul.f32 1.0, %v396
    %s398 = scalar_lea.vmem [#allocation6], 64
    %v399 = vld [vmem:[%s398] sm:$0xff]
    %v400 = vsub.f32 %v397, %v399
    %v401 = vmul.f32 %v400, %v400
    %v402 = vadd.f32 %v376, %v401
    %s403 = scalar_lea.vmem [#allocation2], 128
    %v404 = vld [vmem:[%s403] sm:$0xff]
    %v405 = vmul.f32 %v404, 1.442695
    %v406 = vpow.pop %v405
    %s407 = sld [smem:[#allocation8 + $0x80]]
    %v408 = vstv %s407
    %v409 = vmul.f32 %v406, %v408
    %s410 = scalar_lea.vmem [#allocation6], 72
    %v411 = vld [vmem:[%s410] sm:$0xff]
    %v412 = vsub.f32 %v409, %v411
    %v413 = vmul.f32 %v412, %v412
    %v414 = vadd.f32 %v402, %v413
    %s415 = scalar_lea.vmem [#allocation2], 136
    %v416 = vld [vmem:[%s415] sm:$0xff]
    %v417 = vmul.f32 %v416, 1.442695
    %v418 = vpow.pop %v417
    %s419 = sld [smem:[#allocation8 + $0x81]]
    %v420 = vstv %s419
    %v421 = vmul.f32 %v418, %v420
    %s422 = scalar_lea.vmem [#allocation6], 80
    %v423 = vld [vmem:[%s422] sm:$0xff]
    %v424 = vsub.f32 %v421, %v423
    %v425 = vmul.f32 %v424, %v424
    %v426 = vadd.f32 %v414, %v425
    %v427 = vsel %vm301, %v426, 0.0
    %v428 = vadd.f32 %v205, %v427
    %s429 = scalar_lea.vmem [#allocation2], 144
    %v430 = vld [vmem:[%s429] sm:$0xff]
    %s431 = scalar_lea.vmem [#allocation2], 152
    %v432 = vld [vmem:[%s431] sm:$0xff]
    %v433 = vmax.f32 %v430, %v432
    %s434 = scalar_lea.vmem [#allocation2], 160
    %v435 = vld [vmem:[%s434] sm:$0xff]
    %v436 = vmax.f32 %v433, %v435
    %s437 = scalar_lea.vmem [#allocation2], 168
    %v438 = vld [vmem:[%s437] sm:$0xff]
    %v439 = vmax.f32 %v436, %v438
    %s440 = scalar_lea.vmem [#allocation2], 176
    %v441 = vld [vmem:[%s440] sm:$0xff]
    %v442 = vmax.f32 %v439, %v441
    %s443 = scalar_lea.vmem [#allocation2], 184
    %v444 = vld [vmem:[%s443] sm:$0xff]
    %v445 = vmax.f32 %v442, %v444
    %s446 = scalar_lea.vmem [#allocation2], 192
    %v447 = vld [vmem:[%s446] sm:$0xff]
    %v448 = vmax.f32 %v445, %v447
    %s449 = scalar_lea.vmem [#allocation2], 200
    %v450 = vld [vmem:[%s449] sm:$0xff]
    %v451 = vmax.f32 %v448, %v450
    %s452 = scalar_lea.vmem [#allocation6], 88
    %v453 = vld [vmem:[%s452] sm:$0xff]
    %v454 = vsub.f32 %v430, %v451
    %v455 = vmul.f32 %v454, 1.442695
    %v456 = vpow.pop %v455
    %v457 = vadd.f32 %v456, 0.0
    %vm458 = vcmp.eq.f32.partialorder %v453, 0.0
    %v459 = vsel %vm458, %v430, 0.0
    %v460 = vadd.f32 %v459, 0.0
    %v461 = vsub.f32 %v432, %v451
    %v462 = vmul.f32 %v461, 1.442695
    %v463 = vpow.pop %v462
    %v464 = vadd.f32 %v457, %v463
    %vm465 = vcmp.eq.f32.partialorder %v453, 1.0
    %v466 = vsel %vm465, %v432, 0.0
    %v467 = vadd.f32 %v460, %v466
    %v468 = vsub.f32 %v435, %v451
    %v469 = vmul.f32 %v468, 1.442695
    %v470 = vpow.pop %v469
    %v471 = vadd.f32 %v464, %v470
    %vm472 = vcmp.eq.f32.partialorder %v453, 2.0
    %v473 = vsel %vm472, %v435, 0.0
    %v474 = vadd.f32 %v467, %v473
    %v475 = vsub.f32 %v438, %v451
    %v476 = vmul.f32 %v475, 1.442695
    %v477 = vpow.pop %v476
    %v478 = vadd.f32 %v471, %v477
    %vm479 = vcmp.eq.f32.partialorder %v453, 3.0
    %v480 = vsel %vm479, %v438, 0.0
    %v481 = vadd.f32 %v474, %v480
    %v482 = vsub.f32 %v441, %v451
    %v483 = vmul.f32 %v482, 1.442695
    %v484 = vpow.pop %v483
    %v485 = vadd.f32 %v478, %v484
    %vm486 = vcmp.eq.f32.partialorder %v453, 4.0
    %v487 = vsel %vm486, %v441, 0.0
    %v488 = vadd.f32 %v481, %v487
    %v489 = vsub.f32 %v444, %v451
    %v490 = vmul.f32 %v489, 1.442695
    %v491 = vpow.pop %v490
    %v492 = vadd.f32 %v485, %v491
    %vm493 = vcmp.eq.f32.partialorder %v453, 5.0
    %v494 = vsel %vm493, %v444, 0.0
    %v495 = vadd.f32 %v488, %v494
    %v496 = vsub.f32 %v447, %v451
    %v497 = vmul.f32 %v496, 1.442695
    %v498 = vpow.pop %v497
    %v499 = vadd.f32 %v492, %v498
    %vm500 = vcmp.eq.f32.partialorder %v453, 6.0
    %v501 = vsel %vm500, %v447, 0.0
    %v502 = vadd.f32 %v495, %v501
    %v503 = vsub.f32 %v450, %v451
    %v504 = vmul.f32 %v503, 1.442695
    %v505 = vpow.pop %v504
    %v506 = vadd.f32 %v499, %v505
    %vm507 = vcmp.eq.f32.partialorder %v453, 7.0
    %v508 = vsel %vm507, %v450, 0.0
    %v509 = vadd.f32 %v502, %v508
    %v510 = vlog2.pop %v506
    %v511 = vmul.f32 %v510, 0.6931472
    %v512 = vadd.f32 %v451, %v511
    %v513 = vsub.f32 %v512, %v509
    %v514 = vsel %vm301, %v513, 0.0
    %v515 = vadd.f32 %v292, %v514
    %v516 = vsel %vm301, 1, 0
    %v517 = vcvt.s32.f32 %v516
    %v518 = vadd.f32 %v295, %v517
    %v519 = vsel %vm302, 1, 0
    %v520 = vcvt.s32.f32 %v519
    %v521 = vadd.f32 %v298, %v520
    %s522 = scalar_lea.vmem [#allocation6], 96
    %v523 = vld [vmem:[%s522] sm:$0xff]
    %vm524 = vcmp.eq.f32.partialorder %v523, 1.0
    %vm525 = vcmp.eq.f32.partialorder %v523, 0.0
    %s526 = scalar_lea.vmem [#allocation2], 208
    %v527 = vld [vmem:[%s526] sm:$0xff]
    %v528 = vxor.u32 %v527, 2147483648
    %v529 = vmul.f32 %v528, 1.442695
    %v530 = vpow.pop %v529
    %v531 = vadd.f32 %v530, 1.0
    %v532 = vrcp.pop %v531
    %v533 = vmul.f32 %v531, %v532
    %v534 = vsub.f32 1.0, %v533
    %v535 = vmul.f32 %v532, %v534
    %v536 = vadd.f32 %v532, %v535
    %vm537 = vweird.f32 %v531
    %vm538 = vweird.f32 %v532
    %vm539 = vmor %vm537, %vm538
    %v540 = vsel %vm539, %v532, %v536
    %v541 = vand.u32 2147483647, %v531
    %vm542 = vcmp.eq.f32.partialorder %v541, 8.507059e+37
    %v543 = vand.u32 %v531, 2147483648
    %v544 = vor.u32 1.1754944e-38, %v543
    %v545 = vsel %vm542, %v544, %v540
    %v546 = vmul.f32 1.0, %v545
    %v547 = vsub.f32 0.0, %v546
    %v548 = vmul.f32 %v547, 1.442695
    %v549 = vpow.pop %v548
    %v550 = vadd.f32 %v549, 1.0
    %v551 = vlog2.pop %v550
    %v552 = vmul.f32 %v551, 0.6931472
    %v553 = vmul.f32 -0.5, %v549
    %v554 = vadd.f32 %v553, 1.0
    %v555 = vmul.f32 %v554, %v549
    %v556 = vand.u32 2147483647, %v549
    %vm557 = vcmp.lt.f32.partialorder %v556, 0.0004427343
    %v558 = vsel %vm557, %v555, %v552
    %v559 = vsel %vm524, %v558, 0.0
    %v560 = vadd.f32 %v337, %v559
    %v561 = vmul.f32 %v546, 1.442695
    %v562 = vpow.pop %v561
    %v563 = vadd.f32 %v562, 1.0
    %v564 = vlog2.pop %v563
    %v565 = vmul.f32 %v564, 0.6931472
    %v566 = vmul.f32 -0.5, %v562
    %v567 = vadd.f32 %v566, 1.0
    %v568 = vmul.f32 %v567, %v562
    %v569 = vand.u32 2147483647, %v562
    %vm570 = vcmp.lt.f32.partialorder %v569, 0.0004427343
    %v571 = vsel %vm570, %v568, %v565
    %v572 = vsel %vm525, %v571, 0.0
    %v573 = vadd.f32 %v350, %v572
    %s574 = scalar_lea.vmem [#allocation2], 216
    %v575 = vld [vmem:[%s574] sm:$0xff]
    %v576 = vxor.u32 %v575, 2147483648
    %v577 = vmul.f32 %v576, 1.442695
    %v578 = vpow.pop %v577
    %v579 = vadd.f32 %v578, 1.0
    %v580 = vrcp.pop %v579
    %v581 = vmul.f32 %v579, %v580
    %v582 = vsub.f32 1.0, %v581
    %v583 = vmul.f32 %v580, %v582
    %v584 = vadd.f32 %v580, %v583
    %vm585 = vweird.f32 %v579
    %vm586 = vweird.f32 %v580
    %vm587 = vmor %vm585, %vm586
    %v588 = vsel %vm587, %v580, %v584
    %v589 = vand.u32 2147483647, %v579
    %vm590 = vcmp.eq.f32.partialorder %v589, 8.507059e+37
    %v591 = vand.u32 %v579, 2147483648
    %v592 = vor.u32 1.1754944e-38, %v591
    %v593 = vsel %vm590, %v592, %v588
    %v594 = vmul.f32 1.0, %v593
    %s595 = scalar_lea.vmem [#allocation6], 104
    %v596 = vld [vmem:[%s595] sm:$0xff]
    %v597 = vsub.f32 %v594, %v596
    %v598 = vmul.f32 %v597, %v597
    %v599 = vadd.f32 %v598, 0.0
    %s600 = scalar_lea.vmem [#allocation2], 224
    %v601 = vld [vmem:[%s600] sm:$0xff]
    %v602 = vxor.u32 %v601, 2147483648
    %v603 = vmul.f32 %v602, 1.442695
    %v604 = vpow.pop %v603
    %v605 = vadd.f32 %v604, 1.0
    %v606 = vrcp.pop %v605
    %v607 = vmul.f32 %v605, %v606
    %v608 = vsub.f32 1.0, %v607
    %v609 = vmul.f32 %v606, %v608
    %v610 = vadd.f32 %v606, %v609
    %vm611 = vweird.f32 %v605
    %vm612 = vweird.f32 %v606
    %vm613 = vmor %vm611, %vm612
    %v614 = vsel %vm613, %v606, %v610
    %v615 = vand.u32 2147483647, %v605
    %vm616 = vcmp.eq.f32.partialorder %v615, 8.507059e+37
    %v617 = vand.u32 %v605, 2147483648
    %v618 = vor.u32 1.1754944e-38, %v617
    %v619 = vsel %vm616, %v618, %v614
    %v620 = vmul.f32 1.0, %v619
    %s621 = scalar_lea.vmem [#allocation6], 112
    %v622 = vld [vmem:[%s621] sm:$0xff]
    %v623 = vsub.f32 %v620, %v622
    %v624 = vmul.f32 %v623, %v623
    %v625 = vadd.f32 %v599, %v624
    %s626 = scalar_lea.vmem [#allocation2], 232
    %v627 = vld [vmem:[%s626] sm:$0xff]
    %v628 = vmul.f32 %v627, 1.442695
    %v629 = vpow.pop %v628
    %s630 = sld [smem:[#allocation8 + $0x100]]
    %v631 = vstv %s630
    %v632 = vmul.f32 %v629, %v631
    %s633 = scalar_lea.vmem [#allocation6], 120
    %v634 = vld [vmem:[%s633] sm:$0xff]
    %v635 = vsub.f32 %v632, %v634
    %v636 = vmul.f32 %v635, %v635
    %v637 = vadd.f32 %v625, %v636
    %s638 = scalar_lea.vmem [#allocation2], 240
    %v639 = vld [vmem:[%s638] sm:$0xff]
    %v640 = vmul.f32 %v639, 1.442695
    %v641 = vpow.pop %v640
    %s642 = sld [smem:[#allocation8 + $0x101]]
    %v643 = vstv %s642
    %v644 = vmul.f32 %v641, %v643
    %s645 = scalar_lea.vmem [#allocation6], 128
    %v646 = vld [vmem:[%s645] sm:$0xff]
    %v647 = vsub.f32 %v644, %v646
    %v648 = vmul.f32 %v647, %v647
    %v649 = vadd.f32 %v637, %v648
    %v650 = vsel %vm524, %v649, 0.0
    %v651 = vadd.f32 %v428, %v650
    %s652 = scalar_lea.vmem [#allocation2], 248
    %v653 = vld [vmem:[%s652] sm:$0xff]
    %s654 = scalar_lea.vmem [#allocation2], 256
    %v655 = vld [vmem:[%s654] sm:$0xff]
    %v656 = vmax.f32 %v653, %v655
    %s657 = scalar_lea.vmem [#allocation2], 264
    %v658 = vld [vmem:[%s657] sm:$0xff]
    %v659 = vmax.f32 %v656, %v658
    %s660 = scalar_lea.vmem [#allocation2], 272
    %v661 = vld [vmem:[%s660] sm:$0xff]
    %v662 = vmax.f32 %v659, %v661
    %s663 = scalar_lea.vmem [#allocation2], 280
    %v664 = vld [vmem:[%s663] sm:$0xff]
    %v665 = vmax.f32 %v662, %v664
    %s666 = scalar_lea.vmem [#allocation2], 288
    %v667 = vld [vmem:[%s666] sm:$0xff]
    %v668 = vmax.f32 %v665, %v667
    %s669 = scalar_lea.vmem [#allocation2], 296
    %v670 = vld [vmem:[%s669] sm:$0xff]
    %v671 = vmax.f32 %v668, %v670
    %s672 = scalar_lea.vmem [#allocation2], 304
    %v673 = vld [vmem:[%s672] sm:$0xff]
    %v674 = vmax.f32 %v671, %v673
    %s675 = scalar_lea.vmem [#allocation6], 136
    %v676 = vld [vmem:[%s675] sm:$0xff]
    %v677 = vsub.f32 %v653, %v674
    %v678 = vmul.f32 %v677, 1.442695
    %v679 = vpow.pop %v678
    %v680 = vadd.f32 %v679, 0.0
    %vm681 = vcmp.eq.f32.partialorder %v676, 0.0
    %v682 = vsel %vm681, %v653, 0.0
    %v683 = vadd.f32 %v682, 0.0
    %v684 = vsub.f32 %v655, %v674
    %v685 = vmul.f32 %v684, 1.442695
    %v686 = vpow.pop %v685
    %v687 = vadd.f32 %v680, %v686
    %vm688 = vcmp.eq.f32.partialorder %v676, 1.0
    %v689 = vsel %vm688, %v655, 0.0
    %v690 = vadd.f32 %v683, %v689
    %v691 = vsub.f32 %v658, %v674
    %v692 = vmul.f32 %v691, 1.442695
    %v693 = vpow.pop %v692
    %v694 = vadd.f32 %v687, %v693
    %vm695 = vcmp.eq.f32.partialorder %v676, 2.0
    %v696 = vsel %vm695, %v658, 0.0
    %v697 = vadd.f32 %v690, %v696
    %v698 = vsub.f32 %v661, %v674
    %v699 = vmul.f32 %v698, 1.442695
    %v700 = vpow.pop %v699
    %v701 = vadd.f32 %v694, %v700
    %vm702 = vcmp.eq.f32.partialorder %v676, 3.0
    %v703 = vsel %vm702, %v661, 0.0
    %v704 = vadd.f32 %v697, %v703
    %v705 = vsub.f32 %v664, %v674
    %v706 = vmul.f32 %v705, 1.442695
    %v707 = vpow.pop %v706
    %v708 = vadd.f32 %v701, %v707
    %vm709 = vcmp.eq.f32.partialorder %v676, 4.0
    %v710 = vsel %vm709, %v664, 0.0
    %v711 = vadd.f32 %v704, %v710
    %v712 = vsub.f32 %v667, %v674
    %v713 = vmul.f32 %v712, 1.442695
    %v714 = vpow.pop %v713
    %v715 = vadd.f32 %v708, %v714
    %vm716 = vcmp.eq.f32.partialorder %v676, 5.0
    %v717 = vsel %vm716, %v667, 0.0
    %v718 = vadd.f32 %v711, %v717
    %v719 = vsub.f32 %v670, %v674
    %v720 = vmul.f32 %v719, 1.442695
    %v721 = vpow.pop %v720
    %v722 = vadd.f32 %v715, %v721
    %vm723 = vcmp.eq.f32.partialorder %v676, 6.0
    %v724 = vsel %vm723, %v670, 0.0
    %v725 = vadd.f32 %v718, %v724
    %v726 = vsub.f32 %v673, %v674
    %v727 = vmul.f32 %v726, 1.442695
    %v728 = vpow.pop %v727
    %v729 = vadd.f32 %v722, %v728
    %vm730 = vcmp.eq.f32.partialorder %v676, 7.0
    %v731 = vsel %vm730, %v673, 0.0
    %v732 = vadd.f32 %v725, %v731
    %v733 = vlog2.pop %v729
    %v734 = vmul.f32 %v733, 0.6931472
    %v735 = vadd.f32 %v674, %v734
    %v736 = vsub.f32 %v735, %v732
    %v737 = vsel %vm524, %v736, 0.0
    %v738 = vadd.f32 %v515, %v737
    %v739 = vsel %vm524, 1, 0
    %v740 = vcvt.s32.f32 %v739
    %v741 = vadd.f32 %v518, %v740
    %v742 = vsel %vm525, 1, 0
    %v743 = vcvt.s32.f32 %v742
    %v744 = vadd.f32 %v521, %v743
    %v745 = vld [vmem:[#allocation9] sm:$0xff]
    %v746 = vadd.f32 %v745, %v741
    %747 = vst [vmem:[#allocation9] sm:$0xff] %v746
    %s748 = scalar_lea.vmem [#allocation9], 8
    %v749 = vld [vmem:[%s748] sm:$0xff]
    %v750 = vadd.f32 %v749, %v744
    %751 = vst [vmem:[%s748] sm:$0xff] %v750
    %s752 = scalar_lea.vmem [#allocation9], 16
    %v753 = vld [vmem:[%s752] sm:$0xff]
    %v754 = vadd.f32 %v753, %v651
    %755 = vst [vmem:[%s752] sm:$0xff] %v754
    %s756 = scalar_lea.vmem [#allocation9], 24
    %v757 = vld [vmem:[%s756] sm:$0xff]
    %v758 = vadd.f32 %v757, %v560
    %759 = vst [vmem:[%s756] sm:$0xff] %v758
    %s760 = scalar_lea.vmem [#allocation9], 32
    %v761 = vld [vmem:[%s760] sm:$0xff]
    %v762 = vadd.f32 %v761, %v573
    %763 = vst [vmem:[%s760] sm:$0xff] %v762
    %s764 = scalar_lea.vmem [#allocation9], 40
    %v765 = vld [vmem:[%s764] sm:$0xff]
    %v766 = vadd.f32 %v765, %v738
    %767 = vst [vmem:[%s764] sm:$0xff] %v766
    // Predicated region
    $region30: #{tpu_custom_call.1} parent=1 // pred_check
      _
    $region31: #{tpu_custom_call.1} parent=1 // pred_check_branch
      %769 = sbr.rel (0) target = $region33
    $region32: #{tpu_custom_call.1} parent=1 // pred_region
      %771 = vsyncadd [#allocation4], 0
      %s772 = sshll.u32 [#allocation9], 4
      %s773 = int_to_ptr.vmem [resolvable:$true] %s772
      %s774 = sshll.u32 %s3, 4
      %s775 = int_to_ptr.hbm [resolvable:$true] %s774
      %780 = dma.vmem_to_hbm [thread:$0]  %s773, 768, %s775, [#allocation4], 128, 128, 8
    $region33: #{tpu_custom_call.1} parent=1 // pred_fallthru
      _
    // Predicated region
    $region34: #{tpu_custom_call.1} parent=1 // pred_check
      _
    $region35: #{tpu_custom_call.1} parent=1 // pred_check_branch
      %782 = sbr.rel (0) target = $region37
    $region36: #{tpu_custom_call.1} parent=1 // pred_region
      %784 = dma.done [#allocation4], 768
    $region37: #{tpu_custom_call.1} parent=1 // pred_fallthru
      _
    %785 = vsyncpa [#allocation3], 1
    %786 = vsyncpa [#allocation7], 1
    %787 = vsyncpa [#allocation4], 1
    %788 = vsyncpa [#allocation5], 1

</llo_original>
